<compile_context>
chip_gen: v6e
topology: v6e:2x2x1
jax: 0.10.0
libtpu: 0.0.40
codegen_flags: <defaults>
</compile_context>

<pallas_src>
import functools

import jax
import jax.numpy as jnp
from jax.experimental import pallas as pl
from jax.experimental.pallas import tpu as pltpu


# Exact softmax normalization for validation; set True in production for the
# EUP approximate reciprocal (off the VALU critical path, ~1e-3 rel err).
_APPROX_SOFTMAX = False
_LN_EPS = 1e-5  # torch.nn.LayerNorm default


# --------------------------------------------------------------------------
# Hardware-aware sizing helpers
# --------------------------------------------------------------------------
@functools.lru_cache(maxsize=None)
def _vmem_limit_bytes():
    """Generation-aware scoped-VMEM request (~75% of physical VMEM)."""
    cap = None
    try:
        cap = getattr(pltpu.get_tpu_info(), "vmem_capacity_bytes", None)
    except Exception:
        cap = None
    if not cap:
        cap = 64 * 1024 * 1024          # assume the smallest (v7x) if unknown
    return int(cap) * 3 // 4            # headroom for compiler scratch / sems


def _seq_tile_target():
    # v5e/v6e (128 MiB VMEM) afford 512-wide sequence tiles; v7x (64 MiB) -> 256.
    return 512 if _vmem_limit_bytes() >= 80 * 1024 * 1024 else 256


def _pick_tile(n, target):
    """Largest multiple-of-8 divisor of n that is <= target; falls back to n."""
    t = min(n, target)
    t -= t % 8
    while t >= 8:
        if n % t == 0:
            return t
        t -= 8
    return n   # full dim always satisfies the (8, 128) rule


def _ff_tile(d_ff, target=512):
    t = min(d_ff, target)
    t -= t % 128
    while t >= 128:
        if d_ff % t == 0:
            return t
        t -= 128
    return d_ff


@functools.lru_cache(maxsize=None)
def _single_buffering_supported():
    """Probe pl.Buffered(1) (single-buffered constant blocks) once."""
    try:
        def _copy(x_ref, o_ref):
            o_ref[...] = x_ref[...]

        fn = pl.pallas_call(
            _copy,
            out_shape=jax.ShapeDtypeStruct((8, 128), jnp.float32),
            grid=(1,),
            in_specs=[pl.BlockSpec((8, 128), lambda i: (0, 0),
                                   pipeline_mode=pl.Buffered(1))],
            out_specs=pl.BlockSpec((8, 128), lambda i: (0, 0)),
        )
        jax.block_until_ready(fn(jnp.zeros((8, 128), jnp.float32)))
        return True
    except Exception:
        return False


def _const_spec(shape):
    """Full-array block whose index never changes (weights / biases / LN params).

    Single-buffered when supported: double-buffering a constant block only
    doubles its VMEM footprint (several MiB of weights at production D).
    """
    zeros = (0,) * len(shape)
    index_map = lambda *_: zeros
    if _single_buffering_supported():
        return pl.BlockSpec(shape, index_map, pipeline_mode=pl.Buffered(1))
    return pl.BlockSpec(shape, index_map)


# --------------------------------------------------------------------------
# Kernels
# --------------------------------------------------------------------------
def _add_layer_norm(x, delta, gamma, beta, eps):
    """LayerNorm(x + delta); stats in f32, result cast back to x.dtype."""
    y = x.astype(jnp.float32) + delta
    mu = jnp.mean(y, axis=-1, keepdims=True)
    var = jnp.mean((y - mu) ** 2, axis=-1, keepdims=True)
    y_hat = (y - mu) * jax.lax.rsqrt(var + eps)
    return (y_hat * gamma + beta).astype(x.dtype)


def _mha_ln_kernel(xq_ref, kv_ref, wq_ref, bq_ref, wkv_ref, bkv_ref,
                   wo_ref, bo_ref, g_ref, beta_ref, o_ref, k_scr, v_scr,
                   *, eps=_LN_EPS):
    """out = LayerNorm(xq + MHA(xq, kv, kv)) for one (batch, query-tile).

    Grid is (batch="parallel", seq-tile="arbitrary"): the K/V projection runs
    once per batch at i == 0 and persists in VMEM scratch across query tiles.
    """
    i = pl.program_id(1)
    xq = xq_ref[0]                                   # (Tq, D) query + residual
    tq, d_model = xq.shape
    n_kv, n_heads, kv_tile, d_head = k_scr.shape
    in_dtype = xq.dtype
    scale = 1.0 / (d_head ** 0.5)

    # ---- K/V projection, once per batch, tiled over Sk to bound transients.
    @pl.when(i == 0)
    def _():
        @pl.loop(0, n_kv)
        def _(j):
            off = pl.multiple_of(j * kv_tile, kv_tile)
            kv_blk = kv_ref[0, pl.ds(off, kv_tile), :]            # (tk, D)
            kvp = (jnp.dot(kv_blk, wkv_ref[...],
                           preferred_element_type=jnp.float32)
                   + bkv_ref[...]).astype(in_dtype)               # cast once
            k_blk = kvp[:, :d_model].reshape(kv_tile, n_heads, d_head)
            v_blk = kvp[:, d_model:].reshape(kv_tile, n_heads, d_head)
            k_scr[j] = pltpu.einshape("shd->hsd", k_blk)          # (H, tk, dh)
            v_scr[j] = pltpu.einshape("shd->hsd", v_blk)

    # ---- Q projection; fold 1/sqrt(dh) into q (Tq*dh muls instead of Tq*Sk).
    q = jnp.dot(xq, wq_ref[...], preferred_element_type=jnp.float32) + bq_ref[...]
    q = (q * scale).astype(in_dtype)
    qh = pltpu.einshape("shd->hsd", q.reshape(tq, n_heads, d_head))  # (H,Tq,dh)

    # ---- Flash-style online softmax over K/V tiles (never materializes the
    #      full (H, Tq, Sk) scores; VMEM use is independent of Sk).
    def body(j, carry):
        m, l, acc = carry
        k_blk = k_scr[j]                                           # (H, tk, dh)
        v_blk = v_scr[j]
        s = jnp.einsum("hqd,hkd->hqk", qh, k_blk,
                       preferred_element_type=jnp.float32)         # (H, Tq, tk)
        m_new = jnp.maximum(m, jnp.max(s, axis=-1, keepdims=True))
        alpha = jnp.exp(m - m_new)
        # TODO(synk): bf16 exp on v6e/v7x doubles EUP throughput here.
        p = jnp.exp(s - m_new)
        l = alpha * l + jnp.sum(p, axis=-1, keepdims=True)
        acc = alpha * acc + jnp.einsum("hqk,hkd->hqd", p.astype(in_dtype), v_blk,
                                       preferred_element_type=jnp.float32)
        return m_new, l, acc

    m0 = jnp.full((n_heads, tq, 1), -jnp.inf, jnp.float32)
    l0 = jnp.zeros((n_heads, tq, 1), jnp.float32)
    a0 = jnp.zeros((n_heads, tq, d_head), jnp.float32)
    m, l, acc = jax.lax.fori_loop(0, n_kv, body, (m0, l0, a0))

    ctx = acc * pl.reciprocal(l, approx=_APPROX_SOFTMAX)
    ctx = pltpu.einshape("hsd->shd", ctx).reshape(tq, d_model)      # (Tq, D)

    attn = jnp.dot(ctx.astype(wo_ref.dtype), wo_ref[...],
                   preferred_element_type=jnp.float32) + bo_ref[...]

    # Fused residual add + LayerNorm.
    o_ref[0] = _add_layer_norm(xq, attn, g_ref[...], beta_ref[...], eps)


def _ffn_ln_resident_kernel(x_ref, w1_ref, b1_ref, w2_ref, b2_ref, g_ref,
                            beta_ref, o_ref, *, eps=_LN_EPS):
    """out = LayerNorm(x + W2·relu(W1·x + b1) + b2); full w1/w2 stay in VMEM."""
    x = x_ref[0]                                                    # (Tq, D)
    h = jnp.dot(x, w1_ref[...], preferred_element_type=jnp.float32) + b1_ref[...]
    h = jnp.maximum(h, 0.0).astype(x.dtype)                         # (Tq, d_ff)
    ff = jnp.dot(h, w2_ref[...], preferred_element_type=jnp.float32) + b2_ref[...]
    o_ref[0] = _add_layer_norm(x, ff, g_ref[...], beta_ref[...], eps)


def _ffn_ln_reduce_kernel(x_ref, w1_ref, b1_ref, w2_ref, b2_ref, g_ref,
                          beta_ref, o_ref, acc_ref, *, eps=_LN_EPS):
    """Large-model FFN: d_ff is the innermost 'arbitrary' grid reduction axis.

    The accumulator contract (zero at kf==0, write at the last kf) requires the
    d_ff axis to stay innermost + 'arbitrary'; do not reorder the grid.
    """
    kf = pl.program_id(2)

    @pl.when(kf == 0)
    def _():
        acc_ref[...] = jnp.zeros_like(acc_ref)

    x = x_ref[0]                                                    # (Tq, D)
    h = jnp.dot(x, w1_ref[...], preferred_element_type=jnp.float32) + b1_ref[...]
    h = jnp.maximum(h, 0.0).astype(x.dtype)                         # (Tq, tf)
    acc_ref[...] += jnp.dot(h, w2_ref[...],
                            preferred_element_type=jnp.float32)     # (Tq, D)

    @pl.when(kf == pl.num_programs(2) - 1)
    def _():
        o_ref[0] = _add_layer_norm(x, acc_ref[...] + b2_ref[...],
                                   g_ref[...], beta_ref[...], eps)


# --------------------------------------------------------------------------
# Wrappers
# --------------------------------------------------------------------------
def mha_add_ln(xq, kv, wq, bq, wkv, bkv, wo, bo, gamma, beta, *, n_heads,
               kv_tile_target=512):
    """LayerNorm(xq + MultiHeadAttention(xq, kv, kv))."""
    B, Sq, D = xq.shape
    Sk = kv.shape[1]
    assert D % n_heads == 0
    d_head = D // n_heads

    tq = _pick_tile(Sq, _seq_tile_target())
    kv_tile = _pick_tile(Sk, kv_tile_target)
    n_kv = Sk // kv_tile

    grid = (B, Sq // tq)
    return pl.pallas_call(
        _mha_ln_kernel,
        out_shape=jax.ShapeDtypeStruct((B, Sq, D), xq.dtype),
        grid=grid,
        in_specs=[
            pl.BlockSpec((1, tq, D), lambda b, i: (b, i, 0)),   # query/residual
            # Full K/V sequence; its block index only changes with b, so Pallas
            # elides the re-DMA across the inner seq-tile axis.
            pl.BlockSpec((1, Sk, D), lambda b, i: (b, 0, 0)),
            _const_spec(wq.shape), _const_spec(bq.shape),
            _const_spec(wkv.shape), _const_spec(bkv.shape),
            _const_spec(wo.shape), _const_spec(bo.shape),
            _const_spec(gamma.shape), _const_spec(beta.shape),
        ],
        out_specs=pl.BlockSpec((1, tq, D), lambda b, i: (b, i, 0)),
        scratch_shapes=[
            pltpu.VMEM((n_kv, n_heads, kv_tile, d_head), xq.dtype),  # K (head-major)
            pltpu.VMEM((n_kv, n_heads, kv_tile, d_head), xq.dtype),  # V (head-major)
        ],
        compiler_params=pltpu.CompilerParams(
            # Batch stays "parallel" (keeps both v7x TensorCores busy for B>=2);
            # seq tiles are "arbitrary" so the K/V scratch persists across them.
            dimension_semantics=("parallel", "arbitrary"),
            vmem_limit_bytes=_vmem_limit_bytes()),
    )(xq, kv, wq, bq, wkv, bkv, wo, bo, gamma, beta)


def ffn_add_ln(x, w1, b1, w2, b2, gamma, beta, *, force_reduction=False):
    """LayerNorm(x + Linear2(relu(Linear1(x))))."""
    B, S, D = x.shape
    d_ff = w1.shape[1]
    tq = _pick_tile(S, _seq_tile_target())
    budget = _vmem_limit_bytes()

    weight_bytes = (w1.size + b1.size + w2.size + b2.size) * w1.dtype.itemsize
    hidden_bytes = tq * d_ff * (4 + x.dtype.itemsize)     # f32 pre-ReLU + cast
    act_bytes = 4 * tq * D * x.dtype.itemsize             # double-buffered x/out
    resident = (not force_reduction) and (
        weight_bytes + hidden_bytes + act_bytes < budget * 2 // 3)

    if resident:
        # Weights stay VMEM-resident: no per-step weight refetch from HBM.
        return pl.pallas_call(
            _ffn_ln_resident_kernel,
            out_shape=jax.ShapeDtypeStruct((B, S, D), x.dtype),
            grid=(B, S // tq),
            in_specs=[
                pl.BlockSpec((1, tq, D), lambda b, i: (b, i, 0)),
                _const_spec(w1.shape), _const_spec(b1.shape),
                _const_spec(w2.shape), _const_spec(b2.shape),
                _const_spec(gamma.shape), _const_spec(beta.shape),
            ],
            out_specs=pl.BlockSpec((1, tq, D), lambda b, i: (b, i, 0)),
            compiler_params=pltpu.CompilerParams(
                dimension_semantics=("parallel", "parallel"),
                vmem_limit_bytes=budget),
        )(x, w1, b1, w2, b2, gamma, beta)

    # Large-model fallback: d_ff as innermost "arbitrary" reduction axis.
    tf = _ff_tile(d_ff)
    return pl.pallas_call(
        _ffn_ln_reduce_kernel,
        out_shape=jax.ShapeDtypeStruct((B, S, D), x.dtype),
        grid=(B, S // tq, d_ff // tf),
        in_specs=[
            pl.BlockSpec((1, tq, D), lambda b, i, k: (b, i, 0)),
            pl.BlockSpec((D, tf), lambda b, i, k: (0, k)),
            pl.BlockSpec((1, tf), lambda b, i, k: (0, k)),
            pl.BlockSpec((tf, D), lambda b, i, k: (k, 0)),
            _const_spec(b2.shape), _const_spec(gamma.shape), _const_spec(beta.shape),
        ],
        out_specs=pl.BlockSpec((1, tq, D), lambda b, i, k: (b, i, 0)),
        scratch_shapes=[pltpu.VMEM((tq, D), jnp.float32)],
        compiler_params=pltpu.CompilerParams(
            dimension_semantics=("parallel", "parallel", "arbitrary"),
            vmem_limit_bytes=budget),
    )(x, w1, b1, w2, b2, gamma, beta)


def prepare_params(params):
    """One-time parameter prep: fuse K/V projection weights into (D, 2D)."""
    def prep_attn(a):
        wq, bq, wk, bk, wv, bv, wo, bo = a
        return (wq, bq,
                jnp.concatenate([wk, wv], axis=1),
                jnp.concatenate([bk, bv], axis=1),
                wo, bo)
    return {
        "self_attn": prep_attn(params["self_attn"]),
        "cross_attn": prep_attn(params["cross_attn"]),
        "ffn": params["ffn"],
        "norm1": params["norm1"],
        "norm2": params["norm2"],
        "norm3": params["norm3"],
    }


def decoder_layer_forward(x, memory, prepared_params, *, n_heads):
    # dropout1/dropout2 have p = 0.0 in the reference module -> identity.
    p = prepared_params
    x1 = mha_add_ln(x, x, *p["self_attn"], *p["norm1"], n_heads=n_heads)
    x2 = mha_add_ln(x1, memory, *p["cross_attn"], *p["norm2"], n_heads=n_heads)
    x3 = ffn_add_ln(x2, *p["ffn"], *p["norm3"])
    return x3


# --------------------------------------------------------------------------
# Pure-JAX reference (correctness check)
# --------------------------------------------------------------------------
def _ref_mha(x, kv, wq, bq, wk, bk, wv, bv, wo, bo, n_heads):
    B, Sq, D = x.shape
    Sk = kv.shape[1]
    dh = D // n_heads
    q = (x @ wq + bq).reshape(B, Sq, n_heads, dh).transpose(0, 2, 1, 3)
    k = (kv @ wk + bk).reshape(B, Sk, n_heads, dh).transpose(0, 2, 1, 3)
    v = (kv @ wv + bv).reshape(B, Sk, n_heads, dh).transpose(0, 2, 1, 3)
    s = jnp.einsum("bhqd,bhkd->bhqk", q, k) / (dh ** 0.5)
    p = jax.nn.softmax(s, axis=-1)
    ctx = jnp.einsum("bhqk,bhkd->bhqd", p, v).transpose(0, 2, 1, 3).reshape(B, Sq, D)
    return ctx @ wo + bo


def _ref_ln(y, gamma, beta):
    mu = jnp.mean(y, axis=-1, keepdims=True)
    var = jnp.mean((y - mu) ** 2, axis=-1, keepdims=True)
    return (y - mu) * jax.lax.rsqrt(var + _LN_EPS) * gamma + beta


def _ref_forward(x, memory, params, n_heads):
    p = params
    x1 = _ref_ln(x + _ref_mha(x, x, *p["self_attn"], n_heads), *p["norm1"])
    x2 = _ref_ln(x1 + _ref_mha(x1, memory, *p["cross_attn"], n_heads), *p["norm2"])
    w1, b1, w2, b2 = p["ffn"]
    ff = jnp.maximum(x2 @ w1 + b1, 0.0) @ w2 + b2
    return _ref_ln(x2 + ff, *p["norm3"])


# --------------------------------------------------------------------------
# Params + main
# --------------------------------------------------------------------------
def _init_params(key, d_model, d_ff):
    ks = jax.random.split(key, 16)
    scale_d = 1.0 / (d_model ** 0.5)
    scale_f = 1.0 / (d_ff ** 0.5)

    def lin(k, din, dout, scale):
        kw, kb = jax.random.split(k)
        w = jax.random.normal(kw, (din, dout), jnp.float32) * scale
        b = jax.random.normal(kb, (1, dout), jnp.float32) * 0.01
        return w, b

    def attn(keys):
        wq, bq = lin(keys[0], d_model, d_model, scale_d)
        wk, bk = lin(keys[1], d_model, d_model, scale_d)
        wv, bv = lin(keys[2], d_model, d_model, scale_d)
        wo, bo = lin(keys[3], d_model, d_model, scale_d)
        return (wq, bq, wk, bk, wv, bv, wo, bo)

    def norm(k):
        kg, kb = jax.random.split(k)
        gamma = 1.0 + 0.1 * jax.random.normal(kg, (1, d_model), jnp.float32)
        beta = 0.1 * jax.random.normal(kb, (1, d_model), jnp.float32)
        return (gamma, beta)

    w1, b1 = lin(ks[8], d_model, d_ff, scale_d)
    w2, b2 = lin(ks[9], d_ff, d_model, scale_f)

    return {
        "self_attn": attn(ks[0:4]),
        "cross_attn": attn(ks[4:8]),
        "ffn": (w1, b1, w2, b2),
        "norm1": norm(ks[10]),
        "norm2": norm(ks[11]),
        "norm3": norm(ks[12]),
    }


if __name__ == "__main__":
    # Small demo shapes (at D=32 lanes are mostly idle; use D >= 512, S >= 512,
    # d_ff >= 2048 and bf16 activations/weights for meaningful perf numbers).
    B, S_dec, S_enc = 2, 8, 16
    d_model, d_ff, n_heads = 32, 64, 4

    key = jax.random.PRNGKey(0)
    k_x, k_m, k_p = jax.random.split(key, 3)
    x = jax.random.normal(k_x, (B, S_dec, d_model), jnp.float32)
    memory = jax.random.normal(k_m, (B, S_enc, d_model), jnp.float32)
    params = _init_params(k_p, d_model, d_ff)
    prepared = prepare_params(params)   # fuse wk/wv once, not per forward call

    out = decoder_layer_forward(x, memory, prepared, n_heads=n_heads)
    out = jax.block_until_ready(out)

    ref = _ref_forward(x, memory, params, n_heads)
    assert out.shape == (B, S_dec, d_model)
    assert bool(jnp.all(jnp.isfinite(out)))
    # Exact softmax reciprocal + f32 path => tight tolerance.
    assert bool(jnp.allclose(out, ref, atol=1e-4, rtol=1e-4))

    # Also exercise the multi-tile flash path (2 K/V tiles over S_enc=16).
    cross_small = mha_add_ln(x, memory, *prepared["cross_attn"], *params["norm2"],
                             n_heads=n_heads, kv_tile_target=8)
    cross_small = jax.block_until_ready(cross_small)
    cross_ref = _ref_ln(x + _ref_mha(x, memory, *params["cross_attn"], n_heads),
                        *params["norm2"])
    assert bool(jnp.allclose(cross_small, cross_ref, atol=1e-4, rtol=1e-4))

    # Also exercise the large-model FFN path (d_ff as a grid reduction axis).
    w1, b1, w2, b2 = params["ffn"]
    ffn_red = ffn_add_ln(x, w1, b1, w2, b2, *params["norm3"], force_reduction=True)
    ffn_red = jax.block_until_ready(ffn_red)
    ffn_ref = _ref_ln(x + (jnp.maximum(x @ w1 + b1, 0.0) @ w2 + b2), *params["norm3"])
    assert bool(jnp.allclose(ffn_red, ffn_ref, atol=1e-4, rtol=1e-4))

    print("KERNEL_OK")
</pallas_src>

<mosaic_0001>
module attributes {stable_mosaic.version = 11 : i64} {
  func.func @_copy(%arg0: i32, %arg1: memref<8x128xf32, #tpu.memory_space<vmem>>, %arg2: memref<8x128xf32, #tpu.memory_space<vmem>>) attributes {dimension_semantics = [#tpu.dimension_semantics<arbitrary>], iteration_bounds = array<i64: 1>, scalar_prefetch = 0 : i64, scratch_operands = 0 : i64, tpu.core_type = #tpu.core_type<tc>, window_params = [{pipeline_mode = #tpu.pipeline_mode<synchronous>, transform_indices = @transform_0, window_bounds = array<i64: 8, 128>}, {pipeline_mode = #tpu.pipeline_mode<synchronous>, transform_indices = @transform_1, window_bounds = array<i64: 8, 128>}]} {
    %c0 = arith.constant 0 : index
    %c0_0 = arith.constant 0 : index
    %0 = vector.load %arg1[%c0, %c0_0] : memref<8x128xf32, #tpu.memory_space<vmem>>, vector<8x128xf32>
    %c0_1 = arith.constant 0 : index
    %c0_2 = arith.constant 0 : index
    %1 = vector.load %arg2[%c0_1, %c0_2] : memref<8x128xf32, #tpu.memory_space<vmem>>, vector<8x128xf32>
    tpu.vector_store %arg2[%c0_1, %c0_2], %0 {strides = array<i32>} : memref<8x128xf32, #tpu.memory_space<vmem>>, vector<8x128xf32>,
    return
  }
  func.func @transform_0(%arg0: i32) -> (i32, i32) {
    %c0_i32 = arith.constant 0 : i32
    %c0_i32_0 = arith.constant 0 : i32
    %c0_i32_1 = arith.constant 0 : i32
    return %c0_i32, %c0_i32_0 : i32, i32
  }
  func.func @transform_1(%arg0: i32) -> (i32, i32) {
    %c0_i32 = arith.constant 0 : i32
    %c0_i32_0 = arith.constant 0 : i32
    %c0_i32_1 = arith.constant 0 : i32
    return %c0_i32, %c0_i32_0 : i32, i32
  }
}

module attributes {stable_mosaic.version = 11 : i64} {
  func.func @_mha_ln_kernel(%arg0: i32, %arg1: i32, %arg2: memref<1x8x32xf32, #tpu.memory_space<vmem>>, %arg3: memref<1x8x32xf32, #tpu.memory_space<vmem>>, %arg4: memref<32x32xf32, #tpu.memory_space<vmem>>, %arg5: memref<1x32xf32, #tpu.memory_space<vmem>>, %arg6: memref<32x64xf32, #tpu.memory_space<vmem>>, %arg7: memref<1x64xf32, #tpu.memory_space<vmem>>, %arg8: memref<32x32xf32, #tpu.memory_space<vmem>>, %arg9: memref<1x32xf32, #tpu.memory_space<vmem>>, %arg10: memref<1x32xf32, #tpu.memory_space<vmem>>, %arg11: memref<1x32xf32, #tpu.memory_space<vmem>>, %arg12: memref<1x8x32xf32, #tpu.memory_space<vmem>>, %arg13: memref<1x4x8x8xf32, #tpu.memory_space<vmem>>, %arg14: memref<1x4x8x8xf32, #tpu.memory_space<vmem>>) attributes {dimension_semantics = [#tpu.dimension_semantics<parallel>, #tpu.dimension_semantics<arbitrary>], iteration_bounds = array<i64: 2, 1>, scalar_prefetch = 0 : i64, scratch_operands = 2 : i64, tpu.core_type = #tpu.core_type<tc>, window_params = [{transform_indices = @transform_0, window_bounds = array<i64: 1, 8, 32>}, {transform_indices = @transform_1, window_bounds = array<i64: 1, 8, 32>}, {pipeline_mode = #tpu.pipeline_mode<synchronous>, transform_indices = @transform_2, window_bounds = array<i64: 32, 32>}, {pipeline_mode = #tpu.pipeline_mode<synchronous>, transform_indices = @transform_3, window_bounds = array<i64: 1, 32>}, {pipeline_mode = #tpu.pipeline_mode<synchronous>, transform_indices = @transform_4, window_bounds = array<i64: 32, 64>}, {pipeline_mode = #tpu.pipeline_mode<synchronous>, transform_indices = @transform_5, window_bounds = array<i64: 1, 64>}, {pipeline_mode = #tpu.pipeline_mode<synchronous>, transform_indices = @transform_6, window_bounds = array<i64: 32, 32>}, {pipeline_mode = #tpu.pipeline_mode<synchronous>, transform_indices = @transform_7, window_bounds = array<i64: 1, 32>}, {pipeline_mode = #tpu.pipeline_mode<synchronous>, transform_indices = @transform_8, window_bounds = array<i64: 1, 32>}, {pipeline_mode = #tpu.pipeline_mode<synchronous>, transform_indices = @transform_9, window_bounds = array<i64: 1, 32>}, {transform_indices = @transform_10, window_bounds = array<i64: 1, 8, 32>}]} {
    %c0 = arith.constant 0 : index
    %c0_0 = arith.constant 0 : index
    %c0_1 = arith.constant 0 : index
    %0 = vector.load %arg2[%c0, %c0_0, %c0_1] : memref<1x8x32xf32, #tpu.memory_space<vmem>>, vector<1x8x32xf32>
    %1 = vector.shape_cast %0 : vector<1x8x32xf32> to vector<8x32xf32>
    %c0_i32 = arith.constant 0 : i32
    %2 = arith.cmpi eq, %arg1, %c0_i32 : i32
    %3 = arith.extui %2 : i1 to i32
    %c0_i32_2 = arith.constant 0 : i32
    %4 = arith.cmpi ne, %3, %c0_i32_2 : i32
    scf.if %4 {
      %c0_i32_39 = arith.constant 0 : i32
      %c1_i32_40 = arith.constant 1 : i32
      %78 = arith.muli %c0_i32_39, %c1_i32_40 : i32
      %c0_i32_41 = arith.constant 0 : i32
      %79 = arith.addi %c0_i32_41, %78 : i32
      %c8_i32 = arith.constant 8 : i32
      %80 = arith.muli %79, %c8_i32 : i32
      %81 = tpu.assume_multiple %80, 8 : i32
      %c0_42 = arith.constant 0 : index
      %82 = arith.index_cast %81 : i32 to index
      %c0_43 = arith.constant 0 : index
      %83 = vector.load %arg3[%c0_42, %82, %c0_43] : memref<1x8x32xf32, #tpu.memory_space<vmem>>, vector<1x8x32xf32>
      %84 = vector.shape_cast %83 : vector<1x8x32xf32> to vector<8x32xf32>
      %c0_44 = arith.constant 0 : index
      %c0_45 = arith.constant 0 : index
      %85 = vector.load %arg6[%c0_44, %c0_45] : memref<32x64xf32, #tpu.memory_space<vmem>>, vector<32x64xf32>
      %cst_46 = arith.constant dense<0.000000e+00> : vector<8x64xf32>
      %86 = tpu.matmul %84, %85, %cst_46 {dimension_numbers = #tpu.dot_dimension_numbers<[1], [0], [0], [1], [0, 0, 1, 1], [], []>} : vector<8x32xf32>, vector<32x64xf32>, vector<8x64xf32> -> vector<8x64xf32>
      %c0_47 = arith.constant 0 : index
      %c0_48 = arith.constant 0 : index
      %87 = vector.load %arg7[%c0_47, %c0_48] : memref<1x64xf32, #tpu.memory_space<vmem>>, vector<1x64xf32>
      %88 = vector.broadcast %87 : vector<1x64xf32> to vector<8x64xf32>
      %89 = arith.addf %86, %88 : vector<8x64xf32>
      %90 = vector.extract_strided_slice %89 {offsets = [0, 0], sizes = [8, 32], strides = [1, 1]} : vector<8x64xf32> to vector<8x32xf32>
      %91 = vector.shape_cast %90 : vector<8x32xf32> to vector<8x4x8xf32>
      %92 = vector.extract_strided_slice %89 {offsets = [0, 32], sizes = [8, 32], strides = [1, 1]} : vector<8x64xf32> to vector<8x32xf32>
      %93 = vector.shape_cast %92 : vector<8x32xf32> to vector<8x4x8xf32>
      %94 = tpu.transpose %91, [1, 0, 2] : vector<8x4x8xf32> -> vector<4x8x8xf32>
      %95 = arith.index_cast %79 : i32 to index
      %c0_49 = arith.constant 0 : index
      %c0_50 = arith.constant 0 : index
      %c0_51 = arith.constant 0 : index
      %96 = vector.load %arg13[%95, %c0_49, %c0_50, %c0_51] : memref<1x4x8x8xf32, #tpu.memory_space<vmem>>, vector<1x4x8x8xf32>
      %97 = vector.shape_cast %96 : vector<1x4x8x8xf32> to vector<4x8x8xf32>
      %98 = vector.shape_cast %94 : vector<4x8x8xf32> to vector<1x4x8x8xf32>
      tpu.vector_store %arg13[%95, %c0_49, %c0_50, %c0_51], %98 {strides = array<i32>} : memref<1x4x8x8xf32, #tpu.memory_space<vmem>>, vector<1x4x8x8xf32>,
      %99 = tpu.transpose %93, [1, 0, 2] : vector<8x4x8xf32> -> vector<4x8x8xf32>
      %100 = arith.index_cast %79 : i32 to index
      %c0_52 = arith.constant 0 : index
      %c0_53 = arith.constant 0 : index
      %c0_54 = arith.constant 0 : index
      %101 = vector.load %arg14[%100, %c0_52, %c0_53, %c0_54] : memref<1x4x8x8xf32, #tpu.memory_space<vmem>>, vector<1x4x8x8xf32>
      %102 = vector.shape_cast %101 : vector<1x4x8x8xf32> to vector<4x8x8xf32>
      %103 = vector.shape_cast %99 : vector<4x8x8xf32> to vector<1x4x8x8xf32>
      tpu.vector_store %arg14[%100, %c0_52, %c0_53, %c0_54], %103 {strides = array<i32>} : memref<1x4x8x8xf32, #tpu.memory_space<vmem>>, vector<1x4x8x8xf32>,
      %c1_i32_55 = arith.constant 1 : i32
    } else {
    }
    %c0_3 = arith.constant 0 : index
    %c0_4 = arith.constant 0 : index
    %5 = vector.load %arg4[%c0_3, %c0_4] : memref<32x32xf32, #tpu.memory_space<vmem>>, vector<32x32xf32>
    %cst = arith.constant dense<0.000000e+00> : vector<8x32xf32>
    %6 = tpu.matmul %1, %5, %cst {dimension_numbers = #tpu.dot_dimension_numbers<[1], [0], [0], [1], [0, 0, 1, 1], [], []>} : vector<8x32xf32>, vector<32x32xf32>, vector<8x32xf32> -> vector<8x32xf32>
    %c0_5 = arith.constant 0 : index
    %c0_6 = arith.constant 0 : index
    %7 = vector.load %arg5[%c0_5, %c0_6] : memref<1x32xf32, #tpu.memory_space<vmem>>, vector<1x32xf32>
    %8 = vector.broadcast %7 : vector<1x32xf32> to vector<8x32xf32>
    %9 = arith.addf %6, %8 : vector<8x32xf32>
    %cst_7 = arith.constant 0.353553385 : f32
    %10 = vector.broadcast %cst_7 : f32 to vector<8x32xf32>
    %11 = arith.mulf %9, %10 : vector<8x32xf32>
    %12 = vector.shape_cast %11 : vector<8x32xf32> to vector<8x4x8xf32>
    %13 = tpu.transpose %12, [1, 0, 2] : vector<8x4x8xf32> -> vector<4x8x8xf32>
    %cst_8 = arith.constant 0xFF800000 : f32
    %14 = vector.broadcast %cst_8 : f32 to vector<4x8x1xf32>
    %cst_9 = arith.constant 0.000000e+00 : f32
    %15 = vector.broadcast %cst_9 : f32 to vector<4x8x1xf32>
    %cst_10 = arith.constant 0.000000e+00 : f32
    %16 = vector.broadcast %cst_10 : f32 to vector<4x8x8xf32>
    %c0_i32_11 = arith.constant 0 : i32
    %17 = arith.index_cast %c0_i32_11 : i32 to index
    %c0_12 = arith.constant 0 : index
    %c0_13 = arith.constant 0 : index
    %c0_14 = arith.constant 0 : index
    %18 = vector.load %arg13[%17, %c0_12, %c0_13, %c0_14] : memref<1x4x8x8xf32, #tpu.memory_space<vmem>>, vector<1x4x8x8xf32>
    %19 = vector.shape_cast %18 : vector<1x4x8x8xf32> to vector<4x8x8xf32>
    %20 = arith.index_cast %c0_i32_11 : i32 to index
    %c0_15 = arith.constant 0 : index
    %c0_16 = arith.constant 0 : index
    %c0_17 = arith.constant 0 : index
    %21 = vector.load %arg14[%20, %c0_15, %c0_16, %c0_17] : memref<1x4x8x8xf32, #tpu.memory_space<vmem>>, vector<1x4x8x8xf32>
    %22 = vector.shape_cast %21 : vector<1x4x8x8xf32> to vector<4x8x8xf32>
    "tpu.trace_start"() <{level = 10 : i32, message = "hqd,hkd->hqk"}> : () -> ()
    %cst_18 = arith.constant dense<0.000000e+00> : vector<4x8x8xf32>
    %23 = tpu.matmul %13, %19, %cst_18 {dimension_numbers = #tpu.dot_dimension_numbers<[2], [2], [1], [1], [0, 0, 0, 1, 1, 1], [0], [0]>} : vector<4x8x8xf32>, vector<4x8x8xf32>, vector<4x8x8xf32> -> vector<4x8x8xf32>
    "tpu.trace_stop"() : () -> ()
    %cst_19 = arith.constant dense<0xFF800000> : vector<4x8xf32>
    %24 = vector.multi_reduction <maximumf>, %23, %cst_19 [2] : vector<4x8x8xf32> to vector<4x8xf32>
    %25 = vector.shape_cast %24 : vector<4x8xf32> to vector<4x8x1xf32>
    %26 = arith.maximumf %14, %25 : vector<4x8x1xf32>
    %27 = arith.subf %14, %26 : vector<4x8x1xf32>
    %28 = math.exp %27 : vector<4x8x1xf32>
    %29 = vector.broadcast %26 : vector<4x8x1xf32> to vector<4x8x8xf32>
    %30 = arith.subf %23, %29 : vector<4x8x8xf32>
    %31 = math.exp %30 : vector<4x8x8xf32>
    %32 = arith.mulf %28, %15 : vector<4x8x1xf32>
    %cst_20 = arith.constant dense<0.000000e+00> : vector<4x8xf32>
    %33 = vector.multi_reduction <add>, %31, %cst_20 [2] : vector<4x8x8xf32> to vector<4x8xf32>
    %34 = vector.shape_cast %33 : vector<4x8xf32> to vector<4x8x1xf32>
    %35 = arith.addf %32, %34 : vector<4x8x1xf32>
    %36 = vector.broadcast %28 : vector<4x8x1xf32> to vector<4x8x8xf32>
    %37 = arith.mulf %36, %16 : vector<4x8x8xf32>
    "tpu.trace_start"() <{level = 10 : i32, message = "hqk,hkd->hqd"}> : () -> ()
    %cst_21 = arith.constant dense<0.000000e+00> : vector<4x8x8xf32>
    %38 = tpu.matmul %31, %22, %cst_21 {dimension_numbers = #tpu.dot_dimension_numbers<[2], [1], [1], [2], [0, 0, 0, 1, 1, 2], [0], [0]>} : vector<4x8x8xf32>, vector<4x8x8xf32>, vector<4x8x8xf32> -> vector<4x8x8xf32>
    "tpu.trace_stop"() : () -> ()
    %39 = arith.addf %37, %38 : vector<4x8x8xf32>
    %c1_i32 = arith.constant 1 : i32
    %40 = tpu.reciprocal %35 : vector<4x8x1xf32> -> vector<4x8x1xf32>
    %41 = vector.broadcast %40 : vector<4x8x1xf32> to vector<4x8x8xf32>
    %42 = arith.mulf %39, %41 : vector<4x8x8xf32>
    %43 = tpu.transpose %42, [1, 0, 2] : vector<4x8x8xf32> -> vector<8x4x8xf32>
    %44 = vector.shape_cast %43 : vector<8x4x8xf32> to vector<8x32xf32>
    %c0_22 = arith.constant 0 : index
    %c0_23 = arith.constant 0 : index
    %45 = vector.load %arg8[%c0_22, %c0_23] : memref<32x32xf32, #tpu.memory_space<vmem>>, vector<32x32xf32>
    %cst_24 = arith.constant dense<0.000000e+00> : vector<8x32xf32>
    %46 = tpu.matmul %44, %45, %cst_24 {dimension_numbers = #tpu.dot_dimension_numbers<[1], [0], [0], [1], [0, 0, 1, 1], [], []>} : vector<8x32xf32>, vector<32x32xf32>, vector<8x32xf32> -> vector<8x32xf32>
    %c0_25 = arith.constant 0 : index
    %c0_26 = arith.constant 0 : index
    %47 = vector.load %arg9[%c0_25, %c0_26] : memref<1x32xf32, #tpu.memory_space<vmem>>, vector<1x32xf32>
    %48 = vector.broadcast %47 : vector<1x32xf32> to vector<8x32xf32>
    %49 = arith.addf %46, %48 : vector<8x32xf32>
    %c0_27 = arith.constant 0 : index
    %c0_28 = arith.constant 0 : index
    %50 = vector.load %arg10[%c0_27, %c0_28] : memref<1x32xf32, #tpu.memory_space<vmem>>, vector<1x32xf32>
    %c0_29 = arith.constant 0 : index
    %c0_30 = arith.constant 0 : index
    %51 = vector.load %arg11[%c0_29, %c0_30] : memref<1x32xf32, #tpu.memory_space<vmem>>, vector<1x32xf32>
    %52 = arith.addf %1, %49 : vector<8x32xf32>
    %cst_31 = arith.constant dense<0.000000e+00> : vector<8xf32>
    %53 = vector.multi_reduction <add>, %52, %cst_31 [1] : vector<8x32xf32> to vector<8xf32>
    %54 = vector.shape_cast %53 : vector<8xf32> to vector<8x1xf32>
    %cst_32 = arith.constant 3.200000e+01 : f32
    %55 = vector.broadcast %cst_32 : f32 to vector<8x1xf32>
    %56 = arith.divf %54, %55 : vector<8x1xf32>
    %57 = vector.broadcast %56 : vector<8x1xf32> to vector<8x32xf32>
    %58 = arith.subf %52, %57 : vector<8x32xf32>
    %59 = arith.mulf %58, %58 : vector<8x32xf32>
    %cst_33 = arith.constant dense<0.000000e+00> : vector<8xf32>
    %60 = vector.multi_reduction <add>, %59, %cst_33 [1] : vector<8x32xf32> to vector<8xf32>
    %61 = vector.shape_cast %60 : vector<8xf32> to vector<8x1xf32>
    %cst_34 = arith.constant 3.200000e+01 : f32
    %62 = vector.broadcast %cst_34 : f32 to vector<8x1xf32>
    %63 = arith.divf %61, %62 : vector<8x1xf32>
    %64 = vector.broadcast %56 : vector<8x1xf32> to vector<8x32xf32>
    %65 = arith.subf %52, %64 : vector<8x32xf32>
    %cst_35 = arith.constant 9.99999974E-6 : f32
    %66 = vector.broadcast %cst_35 : f32 to vector<8x1xf32>
    %67 = arith.addf %63, %66 : vector<8x1xf32>
    %68 = math.rsqrt %67 : vector<8x1xf32>
    %69 = vector.broadcast %68 : vector<8x1xf32> to vector<8x32xf32>
    %70 = arith.mulf %65, %69 : vector<8x32xf32>
    %71 = vector.broadcast %50 : vector<1x32xf32> to vector<8x32xf32>
    %72 = arith.mulf %70, %71 : vector<8x32xf32>
    %73 = vector.broadcast %51 : vector<1x32xf32> to vector<8x32xf32>
    %74 = arith.addf %72, %73 : vector<8x32xf32>
    %c0_36 = arith.constant 0 : index
    %c0_37 = arith.constant 0 : index
    %c0_38 = arith.constant 0 : index
    %75 = vector.load %arg12[%c0_36, %c0_37, %c0_38] : memref<1x8x32xf32, #tpu.memory_space<vmem>>, vector<1x8x32xf32>
    %76 = vector.shape_cast %75 : vector<1x8x32xf32> to vector<8x32xf32>
    %77 = vector.shape_cast %74 : vector<8x32xf32> to vector<1x8x32xf32>
    tpu.vector_store %arg12[%c0_36, %c0_37, %c0_38], %77 {strides = array<i32>} : memref<1x8x32xf32, #tpu.memory_space<vmem>>, vector<1x8x32xf32>,
    return
  }
  func.func @transform_0(%arg0: i32, %arg1: i32) -> (i32, i32, i32) {
    %c0_i32 = arith.constant 0 : i32
    %c0_i32_0 = arith.constant 0 : i32
    return %arg0, %arg1, %c0_i32 : i32, i32, i32
  }
  func.func @transform_1(%arg0: i32, %arg1: i32) -> (i32, i32, i32) {
    %c0_i32 = arith.constant 0 : i32
    %c0_i32_0 = arith.constant 0 : i32
    %c0_i32_1 = arith.constant 0 : i32
    return %arg0, %c0_i32, %c0_i32_0 : i32, i32, i32
  }
  func.func @transform_2(%arg0: i32, %arg1: i32) -> (i32, i32) {
    %c0_i32 = arith.constant 0 : i32
    %c0_i32_0 = arith.constant 0 : i32
    %c0_i32_1 = arith.constant 0 : i32
    return %c0_i32, %c0_i32_0 : i32, i32
  }
  func.func @transform_3(%arg0: i32, %arg1: i32) -> (i32, i32) {
    %c0_i32 = arith.constant 0 : i32
    %c0_i32_0 = arith.constant 0 : i32
    %c0_i32_1 = arith.constant 0 : i32
    return %c0_i32, %c0_i32_0 : i32, i32
  }
  func.func @transform_4(%arg0: i32, %arg1: i32) -> (i32, i32) {
    %c0_i32 = arith.constant 0 : i32
    %c0_i32_0 = arith.constant 0 : i32
    %c0_i32_1 = arith.constant 0 : i32
    return %c0_i32, %c0_i32_0 : i32, i32
  }
  func.func @transform_5(%arg0: i32, %arg1: i32) -> (i32, i32) {
    %c0_i32 = arith.constant 0 : i32
    %c0_i32_0 = arith.constant 0 : i32
    %c0_i32_1 = arith.constant 0 : i32
    return %c0_i32, %c0_i32_0 : i32, i32
  }
  func.func @transform_6(%arg0: i32, %arg1: i32) -> (i32, i32) {
    %c0_i32 = arith.constant 0 : i32
    %c0_i32_0 = arith.constant 0 : i32
    %c0_i32_1 = arith.constant 0 : i32
    return %c0_i32, %c0_i32_0 : i32, i32
  }
  func.func @transform_7(%arg0: i32, %arg1: i32) -> (i32, i32) {
    %c0_i32 = arith.constant 0 : i32
    %c0_i32_0 = arith.constant 0 : i32
    %c0_i32_1 = arith.constant 0 : i32
    return %c0_i32, %c0_i32_0 : i32, i32
  }
  func.func @transform_8(%arg0: i32, %arg1: i32) -> (i32, i32) {
    %c0_i32 = arith.constant 0 : i32
    %c0_i32_0 = arith.constant 0 : i32
    %c0_i32_1 = arith.constant 0 : i32
    return %c0_i32, %c0_i32_0 : i32, i32
  }
  func.func @transform_9(%arg0: i32, %arg1: i32) -> (i32, i32) {
    %c0_i32 = arith.constant 0 : i32
    %c0_i32_0 = arith.constant 0 : i32
    %c0_i32_1 = arith.constant 0 : i32
    return %c0_i32, %c0_i32_0 : i32, i32
  }
  func.func @transform_10(%arg0: i32, %arg1: i32) -> (i32, i32, i32) {
    %c0_i32 = arith.constant 0 : i32
    %c0_i32_0 = arith.constant 0 : i32
    return %arg0, %arg1, %c0_i32 : i32, i32, i32
  }
}

</mosaic_0001>

<llo_original>
// kernel: tpu_custom_call.1
$region0: #{tpu_custom_call.1}
  #allocation0 [shape = 'u32[]', space=smem, size = 0x4, offset = 0x4, fixed_abs, tag = 'smem constant byte address 0x4 - core index']
  #allocation1 [shape = 'u32[144,128]{1,0:T(1,128)}', space=vmem, size = 0x12000, scoped, tag = 'internal scratch']
  %s0 = inlined_call_operand.hbm [shape: f32[8,128], index: 0, kind: input, shape index: {}]
  %s1 = inlined_call_operand.hbm [shape: f32[8,128], index: 1, kind: output, shape index: {}]
  %s2 = sld [smem:[#allocation0]]
  $region18: #{tpu_custom_call.1} parent=0
    _
  %s4 = ssub.s32 1, %s2
  %s5 = scalar_select 0, %s4, %s2
  $region1: #{tpu_custom_call.1} parent=0
    #allocation2 [shape = 'u8[4096]{0}', space=vmem, size = 0x1000, scoped, tag = 'input window, operand 0, single buffered']
    #allocation3 [shape = 's32[1]{0}', space=sflag, size = 0x4, scoped, tag = 'scoped memory for tpu_custom_call.1']
    #allocation4 [shape = 's32[1]{0}', space=sflag, size = 0x4, scoped, tag = 'scoped memory for tpu_custom_call.1']
    #allocation5 [shape = 'u8[4096]{0}', space=vmem, size = 0x1000, scoped, tag = 'output window, operand 0, single buffered']
    %6 = vsyncpa [#allocation3], 0
    %7 = vsyncpa [#allocation4], 0
    // Predicated region
    $region2: #{tpu_custom_call.1} parent=1 // pred_check
      _
    $region3: #{tpu_custom_call.1} parent=1 // pred_check_branch
      %9 = sbr.rel (0) target = $region5
    $region4: #{tpu_custom_call.1} parent=1 // pred_region
      %s11 = ssub.s32 128, 128
      %12 = vsyncadd [#allocation3], %s11
      %s14 = sshll.u32 [#allocation2], 4
      %s15 = int_to_ptr.vmem [resolvable:$true] %s14
      %17 = dma.hbm_to_vmem [thread:$0]  %s0, 128, %s15, [#allocation3]
    $region5: #{tpu_custom_call.1} parent=1 // pred_fallthru
      _
    // Predicated region
    $region6: #{tpu_custom_call.1} parent=1 // pred_check
      _
    $region7: #{tpu_custom_call.1} parent=1 // pred_check_branch
      %19 = sbr.rel (0) target = $region9
    $region8: #{tpu_custom_call.1} parent=1 // pred_region
      %20 = dma.done [#allocation3], 128
    $region9: #{tpu_custom_call.1} parent=1 // pred_fallthru
      _
    %v21 = vld [vmem:[#allocation2] sm:$0xff]
    %22 = vst [vmem:[#allocation5] sm:$0xff] %v21
    // Predicated region
    $region10: #{tpu_custom_call.1} parent=1 // pred_check
      _
    $region11: #{tpu_custom_call.1} parent=1 // pred_check_branch
      %24 = sbr.rel (0) target = $region13
    $region12: #{tpu_custom_call.1} parent=1 // pred_region
      %s26 = ssub.s32 128, 128
      %27 = vsyncadd [#allocation4], %s26
      %s29 = sshll.u32 [#allocation5], 4
      %s30 = int_to_ptr.vmem [resolvable:$true] %s29
      %32 = dma.vmem_to_hbm [thread:$0]  %s30, 128, %s1, [#allocation4]
    $region13: #{tpu_custom_call.1} parent=1 // pred_fallthru
      _
    // Predicated region
    $region14: #{tpu_custom_call.1} parent=1 // pred_check
      _
    $region15: #{tpu_custom_call.1} parent=1 // pred_check_branch
      %34 = sbr.rel (0) target = $region17
    $region16: #{tpu_custom_call.1} parent=1 // pred_region
      %35 = dma.done [#allocation4], 128
    $region17: #{tpu_custom_call.1} parent=1 // pred_fallthru
      _
    %36 = vsyncpa [#allocation3], 1
    %37 = vsyncpa [#allocation4], 1

// kernel: tpu_custom_call.1
$region0: #{tpu_custom_call.1}
  #allocation0 [shape = 'u32[]', space=smem, size = 0x4, offset = 0x4, fixed_abs, tag = 'smem constant byte address 0x4 - core index']
  #allocation1 [shape = 'u32[144,128]{1,0:T(1,128)}', space=vmem, size = 0x12000, scoped, tag = 'internal scratch']
  #allocation2 [shape = 'f32[1,4,8,8]{3,2,1,0:T(8,128)}', space=vmem, size = 0x4000, scoped, tag = 'scratch operand']
  #allocation3 [shape = 'f32[1,4,8,8]{3,2,1,0:T(8,128)}', space=vmem, size = 0x4000, scoped, tag = 'scratch operand']
  %s0 = inlined_call_operand.hbm [shape: f32[2,8,32], index: 0, kind: input, shape index: {}]
  %s1 = inlined_call_operand.hbm [shape: f32[2,8,32], index: 1, kind: input, shape index: {}]
  %s2 = inlined_call_operand.hbm [shape: f32[32,32], index: 2, kind: input, shape index: {}]
  %s3 = inlined_call_operand.vmem [shape: f32[1,32], index: 3, kind: input, shape index: {}]
  %s4 = inlined_call_operand.hbm [shape: f32[32,64], index: 4, kind: input, shape index: {}]
  %s5 = inlined_call_operand.vmem [shape: f32[1,64], index: 5, kind: input, shape index: {}]
  %s6 = inlined_call_operand.hbm [shape: f32[32,32], index: 6, kind: input, shape index: {}]
  %s7 = inlined_call_operand.vmem [shape: f32[1,32], index: 7, kind: input, shape index: {}]
  %s8 = inlined_call_operand.vmem [shape: f32[1,32], index: 8, kind: input, shape index: {}]
  %s9 = inlined_call_operand.vmem [shape: f32[1,32], index: 9, kind: input, shape index: {}]
  %s10 = inlined_call_operand.hbm [shape: f32[2,8,32], index: 10, kind: output, shape index: {}]
  %s11 = sld [smem:[#allocation0]]
  $region97: #{tpu_custom_call.1} parent=0
    _
  %s13 = ssub.s32 1, %s11
  %s14 = scalar_select 0, %s13, %s11
  $region1: #{tpu_custom_call.1} parent=0
    #allocation4 [shape = 'u8[8192]{0}', space=vmem, size = 0x2000, scoped, tag = 'input window, operand 0']
    #allocation5 [shape = 's32[2]{0}', space=sflag, size = 0x8, scoped, tag = 'scoped memory for tpu_custom_call.1']
    #allocation6 [shape = 's32[2]{0}', space=sflag, size = 0x8, scoped, tag = 'scoped memory for tpu_custom_call.1']
    #allocation7 [shape = 'u8[8192]{0}', space=vmem, size = 0x2000, scoped, tag = 'input window, operand 1']
    #allocation8 [shape = 's32[2]{0}', space=sflag, size = 0x8, scoped, tag = 'scoped memory for tpu_custom_call.1']
    #allocation9 [shape = 'u8[16384]{0}', space=vmem, size = 0x4000, scoped, tag = 'input window, operand 2, single buffered']
    #allocation10 [shape = 'u8[16384]{0}', space=vmem, size = 0x4000, scoped, tag = 'input window, operand 4, single buffered']
    #allocation11 [shape = 's32[1]{0}', space=sflag, size = 0x4, scoped, tag = 'scoped memory for tpu_custom_call.1']
    #allocation12 [shape = 'u8[16384]{0}', space=vmem, size = 0x4000, scoped, tag = 'input window, operand 6, single buffered']
    #allocation13 [shape = 'u8[8192]{0}', space=vmem, size = 0x2000, scoped, tag = 'output window, operand 0']
    %15 = vsyncpa [#allocation5], 0
    %s16 = scalar_lea.sflag [#allocation5], 1
    %17 = vsyncpa %s16, 0
    %18 = vsyncpa [#allocation8], 0
    %s19 = scalar_lea.sflag [#allocation8], 1
    %20 = vsyncpa %s19, 0
    %21 = vsyncpa [#allocation11], 0
    %22 = vsyncpa [#allocation6], 0
    %s23 = scalar_lea.sflag [#allocation6], 1
    %24 = vsyncpa %s23, 0
    loop: start=0, step=1, limit=4
    $region2: #{tpu_custom_call.1} parent=1 // loop_pre_header
      _
    $region3: #{tpu_custom_call.1} parent=1 // loop_header
      %s26 = sphi 0, %s30
      %p27 = scmp.ge.s32.totalorder %s26, 4
      %s33 = sphi 0, %s45
      %s34 = sphi 0, %s41
      %s35 = sphi 0, %s33
      %s36 = sphi 0, %s34
      %s37 = sphi 0, %s35
      %s38 = sphi 0, %s36
      %s50 = sphi 0, %s52
      %s53 = sphi 0, %s50
      %s54 = sphi 0, %s53
      %s70 = sphi 0, %s54
      %s76 = sphi 0, %s78
      %s79 = sphi 0, %s76
      %s80 = sphi 0, %s79
      %s96 = sphi 0, %s80
      %s100 = sphi 0, %s100
      %s102 = sphi 0, %s100
      %s103 = sphi 0, %s102
      %s117 = sphi 0, %s103
      %s121 = sphi 0, %s121
      %s123 = sphi 0, %s121
      %s124 = sphi 0, %s123
      %s138 = sphi 0, %s124
      %s142 = sphi 0, %s142
      %s144 = sphi 0, %s142
      %s145 = sphi 0, %s144
      %s159 = sphi 0, %s145
      %s163 = sphi 0, %s163
      %s165 = sphi 0, %s163
      %s166 = sphi 0, %s165
      %s180 = sphi 0, %s166
      %s184 = sphi 0, %s184
      %s186 = sphi 0, %s184
      %s187 = sphi 0, %s186
      %s201 = sphi 0, %s187
      %s205 = sphi 0, %s205
      %s207 = sphi 0, %s205
      %s208 = sphi 0, %s207
      %s222 = sphi 0, %s208
      %s226 = sphi 0, %s226
      %s228 = sphi 0, %s226
      %s229 = sphi 0, %s228
      %s243 = sphi 0, %s229
      %s247 = sphi 0, %s247
      %s249 = sphi 0, %s247
      %s250 = sphi 0, %s249
      %s264 = sphi 0, %s250
      %s272 = sphi 0, %s274
      %s275 = sphi 0, %s272
      %s276 = sphi 0, %s275
      %s292 = sphi 0, %s276
    $region4: #{tpu_custom_call.1} parent=1 // loop_header_branch
      %29 = sbr.rel (%p27) target = $region8
    $region5: #{tpu_custom_call.1} parent=1 // loop_body
      %s31 = ssub.s32 %s26, 1
      %s32 = ssub.s32 %s26, 2
      %s39 = sadd.s32 1, %s34
      %p40 = scmp.ge.s32.totalorder %s39, 1
      %s41 = scalar_select %p40, 0, %s39
      %s42 = sadd.s32 1, %s33
      %s43 = scalar_select %p40, %s42, %s33
      %p44 = scmp.ge.s32.totalorder %s43, 2
      %s45 = scalar_select %p44, 0, %s43
      %s46 = ssub.s32 %s33, %s45
      %s47 = ssub.s32 %s34, %s41
      %s48 = sor.u32 %s46, %s47
      %p49 = scmp.eq.s32.totalorder %s48, 0
      %s51 = sadd.s32 %s50, 1
      %s52 = scalar_select %p49, %s50, %s51
      %p55 = pneg %p49
      %p56 = scmp.eq.s32.totalorder %s26, 1
      %p57 = por %p55, %p56
      %p58 = scmp.ne.s32.totalorder %s50, %s53
      %p59 = scmp.eq.s32.totalorder %s26, 0
      %p60 = por %p58, %p59
      %p61 = scmp.ne.s32.totalorder %s50, %s53
      %p62 = scmp.eq.s32.totalorder %s31, 1
      %p63 = por %p61, %p62
      %p64 = scmp.ne.s32.totalorder %s53, %s54
      %p65 = scmp.eq.s32.totalorder %s31, 0
      %p66 = por %p64, %p65
      %p67 = scmp.ne.s32.totalorder %s53, %s54
      %p68 = scmp.eq.s32.totalorder %s32, 1
      %p69 = por %p67, %p68
      %p71 = scmp.ne.s32.totalorder %s54, %s70
      %p72 = scmp.eq.s32.totalorder %s32, 0
      %p73 = por %p71, %p72
      %s74 = ssub.s32 %s33, %s45
      %p75 = scmp.eq.s32.totalorder %s74, 0
      %s77 = sadd.s32 %s76, 1
      %s78 = scalar_select %p75, %s76, %s77
      %p81 = pneg %p75
      %p82 = scmp.eq.s32.totalorder %s26, 1
      %p83 = por %p81, %p82
      %p84 = scmp.ne.s32.totalorder %s76, %s79
      %p85 = scmp.eq.s32.totalorder %s26, 0
      %p86 = por %p84, %p85
      %p87 = scmp.ne.s32.totalorder %s76, %s79
      %p88 = scmp.eq.s32.totalorder %s31, 1
      %p89 = por %p87, %p88
      %p90 = scmp.ne.s32.totalorder %s79, %s80
      %p91 = scmp.eq.s32.totalorder %s31, 0
      %p92 = por %p90, %p91
      %p93 = scmp.ne.s32.totalorder %s79, %s80
      %p94 = scmp.eq.s32.totalorder %s32, 1
      %p95 = por %p93, %p94
      %p97 = scmp.ne.s32.totalorder %s80, %s96
      %p98 = scmp.eq.s32.totalorder %s32, 0
      %p99 = por %p97, %p98
      %s101 = sadd.s32 %s100, 1
      %p104 = scmp.eq.s32.totalorder %s26, 1
      %p105 = scmp.ne.s32.totalorder %s100, %s102
      %p106 = scmp.eq.s32.totalorder %s26, 0
      %p107 = por %p105, %p106
      %p108 = scmp.ne.s32.totalorder %s100, %s102
      %p109 = scmp.eq.s32.totalorder %s31, 1
      %p110 = por %p108, %p109
      %p111 = scmp.ne.s32.totalorder %s102, %s103
      %p112 = scmp.eq.s32.totalorder %s31, 0
      %p113 = por %p111, %p112
      %p114 = scmp.ne.s32.totalorder %s102, %s103
      %p115 = scmp.eq.s32.totalorder %s32, 1
      %p116 = por %p114, %p115
      %p118 = scmp.ne.s32.totalorder %s103, %s117
      %p119 = scmp.eq.s32.totalorder %s32, 0
      %p120 = por %p118, %p119
      %s122 = sadd.s32 %s121, 1
      %p125 = scmp.eq.s32.totalorder %s26, 1
      %p126 = scmp.ne.s32.totalorder %s121, %s123
      %p127 = scmp.eq.s32.totalorder %s26, 0
      %p128 = por %p126, %p127
      %p129 = scmp.ne.s32.totalorder %s121, %s123
      %p130 = scmp.eq.s32.totalorder %s31, 1
      %p131 = por %p129, %p130
      %p132 = scmp.ne.s32.totalorder %s123, %s124
      %p133 = scmp.eq.s32.totalorder %s31, 0
      %p134 = por %p132, %p133
      %p135 = scmp.ne.s32.totalorder %s123, %s124
      %p136 = scmp.eq.s32.totalorder %s32, 1
      %p137 = por %p135, %p136
      %p139 = scmp.ne.s32.totalorder %s124, %s138
      %p140 = scmp.eq.s32.totalorder %s32, 0
      %p141 = por %p139, %p140
      %s143 = sadd.s32 %s142, 1
      %p146 = scmp.eq.s32.totalorder %s26, 1
      %p147 = scmp.ne.s32.totalorder %s142, %s144
      %p148 = scmp.eq.s32.totalorder %s26, 0
      %p149 = por %p147, %p148
      %p150 = scmp.ne.s32.totalorder %s142, %s144
      %p151 = scmp.eq.s32.totalorder %s31, 1
      %p152 = por %p150, %p151
      %p153 = scmp.ne.s32.totalorder %s144, %s145
      %p154 = scmp.eq.s32.totalorder %s31, 0
      %p155 = por %p153, %p154
      %p156 = scmp.ne.s32.totalorder %s144, %s145
      %p157 = scmp.eq.s32.totalorder %s32, 1
      %p158 = por %p156, %p157
      %p160 = scmp.ne.s32.totalorder %s145, %s159
      %p161 = scmp.eq.s32.totalorder %s32, 0
      %p162 = por %p160, %p161
      %s164 = sadd.s32 %s163, 1
      %p167 = scmp.eq.s32.totalorder %s26, 1
      %p168 = scmp.ne.s32.totalorder %s163, %s165
      %p169 = scmp.eq.s32.totalorder %s26, 0
      %p170 = por %p168, %p169
      %p171 = scmp.ne.s32.totalorder %s163, %s165
      %p172 = scmp.eq.s32.totalorder %s31, 1
      %p173 = por %p171, %p172
      %p174 = scmp.ne.s32.totalorder %s165, %s166
      %p175 = scmp.eq.s32.totalorder %s31, 0
      %p176 = por %p174, %p175
      %p177 = scmp.ne.s32.totalorder %s165, %s166
      %p178 = scmp.eq.s32.totalorder %s32, 1
      %p179 = por %p177, %p178
      %p181 = scmp.ne.s32.totalorder %s166, %s180
      %p182 = scmp.eq.s32.totalorder %s32, 0
      %p183 = por %p181, %p182
      %s185 = sadd.s32 %s184, 1
      %p188 = scmp.eq.s32.totalorder %s26, 1
      %p189 = scmp.ne.s32.totalorder %s184, %s186
      %p190 = scmp.eq.s32.totalorder %s26, 0
      %p191 = por %p189, %p190
      %p192 = scmp.ne.s32.totalorder %s184, %s186
      %p193 = scmp.eq.s32.totalorder %s31, 1
      %p194 = por %p192, %p193
      %p195 = scmp.ne.s32.totalorder %s186, %s187
      %p196 = scmp.eq.s32.totalorder %s31, 0
      %p197 = por %p195, %p196
      %p198 = scmp.ne.s32.totalorder %s186, %s187
      %p199 = scmp.eq.s32.totalorder %s32, 1
      %p200 = por %p198, %p199
      %p202 = scmp.ne.s32.totalorder %s187, %s201
      %p203 = scmp.eq.s32.totalorder %s32, 0
      %p204 = por %p202, %p203
      %s206 = sadd.s32 %s205, 1
      %p209 = scmp.eq.s32.totalorder %s26, 1
      %p210 = scmp.ne.s32.totalorder %s205, %s207
      %p211 = scmp.eq.s32.totalorder %s26, 0
      %p212 = por %p210, %p211
      %p213 = scmp.ne.s32.totalorder %s205, %s207
      %p214 = scmp.eq.s32.totalorder %s31, 1
      %p215 = por %p213, %p214
      %p216 = scmp.ne.s32.totalorder %s207, %s208
      %p217 = scmp.eq.s32.totalorder %s31, 0
      %p218 = por %p216, %p217
      %p219 = scmp.ne.s32.totalorder %s207, %s208
      %p220 = scmp.eq.s32.totalorder %s32, 1
      %p221 = por %p219, %p220
      %p223 = scmp.ne.s32.totalorder %s208, %s222
      %p224 = scmp.eq.s32.totalorder %s32, 0
      %p225 = por %p223, %p224
      %s227 = sadd.s32 %s226, 1
      %p230 = scmp.eq.s32.totalorder %s26, 1
      %p231 = scmp.ne.s32.totalorder %s226, %s228
      %p232 = scmp.eq.s32.totalorder %s26, 0
      %p233 = por %p231, %p232
      %p234 = scmp.ne.s32.totalorder %s226, %s228
      %p235 = scmp.eq.s32.totalorder %s31, 1
      %p236 = por %p234, %p235
      %p237 = scmp.ne.s32.totalorder %s228, %s229
      %p238 = scmp.eq.s32.totalorder %s31, 0
      %p239 = por %p237, %p238
      %p240 = scmp.ne.s32.totalorder %s228, %s229
      %p241 = scmp.eq.s32.totalorder %s32, 1
      %p242 = por %p240, %p241
      %p244 = scmp.ne.s32.totalorder %s229, %s243
      %p245 = scmp.eq.s32.totalorder %s32, 0
      %p246 = por %p244, %p245
      %s248 = sadd.s32 %s247, 1
      %p251 = scmp.eq.s32.totalorder %s26, 1
      %p252 = scmp.ne.s32.totalorder %s247, %s249
      %p253 = scmp.eq.s32.totalorder %s26, 0
      %p254 = por %p252, %p253
      %p255 = scmp.ne.s32.totalorder %s247, %s249
      %p256 = scmp.eq.s32.totalorder %s31, 1
      %p257 = por %p255, %p256
      %p258 = scmp.ne.s32.totalorder %s249, %s250
      %p259 = scmp.eq.s32.totalorder %s31, 0
      %p260 = por %p258, %p259
      %p261 = scmp.ne.s32.totalorder %s249, %s250
      %p262 = scmp.eq.s32.totalorder %s32, 1
      %p263 = por %p261, %p262
      %p265 = scmp.ne.s32.totalorder %s250, %s264
      %p266 = scmp.eq.s32.totalorder %s32, 0
      %p267 = por %p265, %p266
      %s268 = ssub.s32 %s33, %s45
      %s269 = ssub.s32 %s34, %s41
      %s270 = sor.u32 %s268, %s269
      %p271 = scmp.eq.s32.totalorder %s270, 0
      %s273 = sadd.s32 %s272, 1
      %s274 = scalar_select %p271, %s272, %s273
      %p277 = pneg %p271
      %p278 = scmp.eq.s32.totalorder %s26, 1
      %p279 = por %p277, %p278
      %p280 = scmp.ne.s32.totalorder %s272, %s275
      %p281 = scmp.eq.s32.totalorder %s26, 0
      %p282 = por %p280, %p281
      %p283 = scmp.ne.s32.totalorder %s272, %s275
      %p284 = scmp.eq.s32.totalorder %s31, 1
      %p285 = por %p283, %p284
      %p286 = scmp.ne.s32.totalorder %s275, %s276
      %p287 = scmp.eq.s32.totalorder %s31, 0
      %p288 = por %p286, %p287
      %p289 = scmp.ne.s32.totalorder %s275, %s276
      %p290 = scmp.eq.s32.totalorder %s32, 1
      %p291 = por %p289, %p290
      %p293 = scmp.ne.s32.totalorder %s276, %s292
      %p294 = scmp.eq.s32.totalorder %s32, 0
      %p295 = por %p293, %p294
      %p296 = scmp.le.s32.totalorder 1, %s26
      %p297 = scmp.lt.s32.totalorder %s26, 3
      %p298 = pnand %p296, %p297
      %p299 = pneg %p298
      // Predicated region
      $region9: #{tpu_custom_call.1} parent=5 // pred_check
        _
      $region10: #{tpu_custom_call.1} parent=5 // pred_check_branch
        %301 = sbr.rel (%p298) target = $region12
      $region11: #{tpu_custom_call.1} parent=5 // pred_region
        %s302 = ssub.s32 %s26, 1
        // Predicated region
        $region13: #{tpu_custom_call.1} parent=11 // pred_check
          %p303 = pneg %p113
        $region14: #{tpu_custom_call.1} parent=11 // pred_check_branch
          %305 = sbr.rel (%p303) target = $region16
        $region15: #{tpu_custom_call.1} parent=11 // pred_region
          %s307 = ssub.s32 512, 512
          %308 = vsyncadd [#allocation8], %s307
          %s309 = sshll.u32 [#allocation9], 4
          %s310 = int_to_ptr.vmem [resolvable:$true] %s309
          %315 = dma.hbm_to_vmem [thread:$0]  %s2, 512, %s310, [#allocation8], 128, 128, 8
        $region16: #{tpu_custom_call.1} parent=11 // pred_fallthru
          _
        // Predicated region
        $region17: #{tpu_custom_call.1} parent=11 // pred_check
          %p316 = pneg %p134
        $region18: #{tpu_custom_call.1} parent=11 // pred_check_branch
          %318 = sbr.rel (%p316) target = $region20
        $region19: #{tpu_custom_call.1} parent=11 // pred_region
          _
        $region20: #{tpu_custom_call.1} parent=11 // pred_fallthru
          _
        // Predicated region
        $region21: #{tpu_custom_call.1} parent=11 // pred_check
          %p319 = pneg %p155
        $region22: #{tpu_custom_call.1} parent=11 // pred_check_branch
          %321 = sbr.rel (%p319) target = $region24
        $region23: #{tpu_custom_call.1} parent=11 // pred_region
          %s323 = ssub.s32 512, 512
          %324 = vsyncadd [#allocation11], %s323
          %s325 = sshll.u32 [#allocation10], 4
          %s326 = int_to_ptr.vmem [resolvable:$true] %s325
          %331 = dma.hbm_to_vmem [thread:$0]  %s4, 512, %s326, [#allocation11], 128, 128, 8
        $region24: #{tpu_custom_call.1} parent=11 // pred_fallthru
          _
        // Predicated region
        $region25: #{tpu_custom_call.1} parent=11 // pred_check
          %p332 = pneg %p176
        $region26: #{tpu_custom_call.1} parent=11 // pred_check_branch
          %334 = sbr.rel (%p332) target = $region28
        $region27: #{tpu_custom_call.1} parent=11 // pred_region
          _
        $region28: #{tpu_custom_call.1} parent=11 // pred_fallthru
          _
        // Predicated region
        $region29: #{tpu_custom_call.1} parent=11 // pred_check
          %p335 = pneg %p197
        $region30: #{tpu_custom_call.1} parent=11 // pred_check_branch
          %337 = sbr.rel (%p335) target = $region32
        $region31: #{tpu_custom_call.1} parent=11 // pred_region
          %s339 = ssub.s32 512, 512
          %340 = vsyncadd [#allocation11], %s339
          %s341 = sshll.u32 [#allocation12], 4
          %s342 = int_to_ptr.vmem [resolvable:$true] %s341
          %347 = dma.hbm_to_vmem [thread:$0]  %s6, 512, %s342, [#allocation11], 128, 128, 8
        $region32: #{tpu_custom_call.1} parent=11 // pred_fallthru
          _
        // Predicated region
        $region33: #{tpu_custom_call.1} parent=11 // pred_check
          %p348 = pneg %p218
        $region34: #{tpu_custom_call.1} parent=11 // pred_check_branch
          %350 = sbr.rel (%p348) target = $region36
        $region35: #{tpu_custom_call.1} parent=11 // pred_region
          _
        $region36: #{tpu_custom_call.1} parent=11 // pred_fallthru
          _
        // Predicated region
        $region37: #{tpu_custom_call.1} parent=11 // pred_check
          %p351 = pneg %p239
        $region38: #{tpu_custom_call.1} parent=11 // pred_check_branch
          %353 = sbr.rel (%p351) target = $region40
        $region39: #{tpu_custom_call.1} parent=11 // pred_region
          _
        $region40: #{tpu_custom_call.1} parent=11 // pred_fallthru
          _
        // Predicated region
        $region41: #{tpu_custom_call.1} parent=11 // pred_check
          %p354 = pneg %p260
        $region42: #{tpu_custom_call.1} parent=11 // pred_check_branch
          %356 = sbr.rel (%p354) target = $region44
        $region43: #{tpu_custom_call.1} parent=11 // pred_region
          _
        $region44: #{tpu_custom_call.1} parent=11 // pred_fallthru
          _
      $region12: #{tpu_custom_call.1} parent=5 // pred_fallthru
        _
      %p357 = scmp.lt.s32.totalorder %s26, 2
      // Predicated region
      $region45: #{tpu_custom_call.1} parent=5 // pred_check
        %p358 = pneg %p357
      $region46: #{tpu_custom_call.1} parent=5 // pred_check_branch
        %360 = sbr.rel (%p358) target = $region48
      $region47: #{tpu_custom_call.1} parent=5 // pred_region
        // Predicated region
        $region49: #{tpu_custom_call.1} parent=47 // pred_check
          %p361 = pneg %p60
        $region50: #{tpu_custom_call.1} parent=47 // pred_check_branch
          %363 = sbr.rel (%p361) target = $region52
        $region51: #{tpu_custom_call.1} parent=47 // pred_region
          %s364 = sand.u32 %s50, 1
          %s365 = scalar_lea.sflag [#allocation5], %s364
          %s366 = sand.u32 %s50, 1
          %s367 = smul.addr %s366, 8
          %s368 = scalar_lea.vmem [#allocation4], %s367
          %s370 = ssub.s32 128, 128
          %371 = vsyncadd %s365, %s370
          %s372 = sadd.s32 %s34, %s33
          %s373 = smul.addr %s372, 128
          %s374 = scalar_lea.hbm %s0, %s373
          %s376 = sshll.u32 %s368, 4
          %s377 = int_to_ptr.vmem [resolvable:$true] %s376
          %379 = dma.hbm_to_vmem [thread:$0]  %s374, 128, %s377, %s365
        $region52: #{tpu_custom_call.1} parent=47 // pred_fallthru
          _
        // Predicated region
        $region53: #{tpu_custom_call.1} parent=47 // pred_check
          %p380 = pneg %p86
        $region54: #{tpu_custom_call.1} parent=47 // pred_check_branch
          %382 = sbr.rel (%p380) target = $region56
        $region55: #{tpu_custom_call.1} parent=47 // pred_region
          %s383 = sand.u32 %s26, 1
          %s384 = scalar_lea.sflag [#allocation8], %s383
          %s385 = sand.u32 %s76, 1
          %s386 = smul.addr %s385, 8
          %s387 = scalar_lea.vmem [#allocation7], %s386
          %s389 = ssub.s32 128, 128
          %390 = vsyncadd %s384, %s389
          %s391 = smul.addr %s33, 128
          %s392 = scalar_lea.hbm %s1, %s391
          %s394 = sshll.u32 %s387, 4
          %s395 = int_to_ptr.vmem [resolvable:$true] %s394
          %397 = dma.hbm_to_vmem [thread:$0]  %s392, 128, %s395, %s384
        $region56: #{tpu_custom_call.1} parent=47 // pred_fallthru
          _
      $region48: #{tpu_custom_call.1} parent=5 // pred_fallthru
        _
      %p398 = scmp.le.s32.totalorder 1, %s26
      %p399 = scmp.lt.s32.totalorder %s26, 3
      %p400 = pnand %p398, %p399
      %p401 = pneg %p400
      // Predicated region
      $region57: #{tpu_custom_call.1} parent=5 // pred_check
        _
      $region58: #{tpu_custom_call.1} parent=5 // pred_check_branch
        %403 = sbr.rel (%p400) target = $region60
      $region59: #{tpu_custom_call.1} parent=5 // pred_region
        %s404 = ssub.s32 %s26, 1
        %s405 = sand.u32 %s53, 1
        %s406 = scalar_lea.sflag [#allocation5], %s405
        %s407 = sand.u32 %s53, 1
        %s408 = smul.addr %s407, 8
        %s409 = scalar_lea.vmem [#allocation4], %s408
        // Predicated region
        $region61: #{tpu_custom_call.1} parent=59 // pred_check
          %p410 = pneg %p66
        $region62: #{tpu_custom_call.1} parent=59 // pred_check_branch
          %412 = sbr.rel (%p410) target = $region64
        $region63: #{tpu_custom_call.1} parent=59 // pred_region
          %413 = dma.done %s406, 128
        $region64: #{tpu_custom_call.1} parent=59 // pred_fallthru
          _
        %s414 = sand.u32 %s31, 1
        %s415 = scalar_lea.sflag [#allocation8], %s414
        %s416 = sand.u32 %s79, 1
        %s417 = smul.addr %s416, 8
        %s418 = scalar_lea.vmem [#allocation7], %s417
        // Predicated region
        $region65: #{tpu_custom_call.1} parent=59 // pred_check
          %p419 = pneg %p92
        $region66: #{tpu_custom_call.1} parent=59 // pred_check_branch
          %421 = sbr.rel (%p419) target = $region68
        $region67: #{tpu_custom_call.1} parent=59 // pred_region
          %422 = dma.done %s415, 128
        $region68: #{tpu_custom_call.1} parent=59 // pred_fallthru
          _
        // Predicated region
        $region69: #{tpu_custom_call.1} parent=59 // pred_check
          %p423 = pneg %p113
        $region70: #{tpu_custom_call.1} parent=59 // pred_check_branch
          %425 = sbr.rel (%p423) target = $region72
        $region71: #{tpu_custom_call.1} parent=59 // pred_region
          %426 = dma.done [#allocation8], 512
        $region72: #{tpu_custom_call.1} parent=59 // pred_fallthru
          _
        // Predicated region
        $region73: #{tpu_custom_call.1} parent=59 // pred_check
          %p427 = pneg %p155
        $region74: #{tpu_custom_call.1} parent=59 // pred_check_branch
          %429 = sbr.rel (%p427) target = $region76
        $region75: #{tpu_custom_call.1} parent=59 // pred_region
          %430 = dma.done [#allocation11], 512
        $region76: #{tpu_custom_call.1} parent=59 // pred_fallthru
          _
        // Predicated region
        $region77: #{tpu_custom_call.1} parent=59 // pred_check
          %p431 = pneg %p197
        $region78: #{tpu_custom_call.1} parent=59 // pred_check_branch
          %433 = sbr.rel (%p431) target = $region80
        $region79: #{tpu_custom_call.1} parent=59 // pred_region
          %434 = dma.done [#allocation11], 512
        $region80: #{tpu_custom_call.1} parent=59 // pred_fallthru
          _
        %s435 = sand.u32 %s53, 1
        %s436 = scalar_lea.sflag [#allocation5], %s435
        %s437 = sand.u32 %s53, 1
        %s438 = smul.addr %s437, 8
        %s439 = scalar_lea.vmem [#allocation4], %s438
        %p440 = pneg %p66
        %p441 = pneg %p63
        %s442 = sand.u32 %s31, 1
        %s443 = scalar_lea.sflag [#allocation8], %s442
        %s444 = sand.u32 %s79, 1
        %s445 = smul.addr %s444, 8
        %s446 = scalar_lea.vmem [#allocation7], %s445
        %p447 = pneg %p92
        %p448 = pneg %p89
        %p449 = pneg %p113
        %p450 = pneg %p110
        %p451 = pneg %p134
        %p452 = pneg %p131
        %p453 = pneg %p155
        %p454 = pneg %p152
        %p455 = pneg %p176
        %p456 = pneg %p173
        %p457 = pneg %p197
        %p458 = pneg %p194
        %p459 = pneg %p218
        %p460 = pneg %p215
        %p461 = pneg %p239
        %p462 = pneg %p236
        %p463 = pneg %p260
        %p464 = pneg %p257
        %p465 = pneg %p288
        %p466 = pneg %p285
        %s467 = sand.u32 %s275, 1
        %s468 = scalar_lea.sflag [#allocation6], %s467
        %s469 = sand.u32 %s275, 1
        %s470 = smul.addr %s469, 8
        %s471 = scalar_lea.vmem [#allocation13], %s470
        %v472 = vld [vmem:[%s409] sm:$0xff]
        %p473 = scmp.eq.s32.totalorder %s36, 0
        // Predicated region
        $region81: #{tpu_custom_call.1} parent=59 // pred_check
          %p474 = pneg %p473
        $region82: #{tpu_custom_call.1} parent=59 // pred_check_branch
          %476 = sbr.rel (%p474) target = $region84
        $region83: #{tpu_custom_call.1} parent=59 // pred_region
          %v477 = vld [vmem:[%s418] sm:$0xff]
          %v478 = vld [vmem:[#allocation10] sm:$0xff]
          %v479 = vld [vmem:[#allocation10 + $0x8] sm:$0xff]
          %v480 = vld [vmem:[#allocation10 + $0x10] sm:$0xff]
          %v481 = vld [vmem:[#allocation10 + $0x18] sm:$0xff]
          %v482 = vld [vmem:[%s5] sm:$0x1]
          %v484 = vlaneseq
          %v485 = vshrl.u32 %v484, 7
          %v486 = vsub.s32 0, %v485
          %v487 = vrot.slane %v482, %v486
          %vm489 = vcmask 261120
          %v491 = vsel %vm489, %v477, 0
          %493 = vmatprep.subr.mxu0 0.0
          %494 = vmatpush1.msra.mxu0 0.0
          %495 = vmatprep.subr.mxu0 0.0
          %496 = vmatpush1.msra.mxu0 0.0
          %497 = vmatprep.subr.mxu0 0.0
          %498 = vmatpush1.msra.mxu0 0.0
          %499 = vmatprep.subr.mxu0 0.0
          %500 = vmatpush1.msra.mxu0 0.0
          %501 = vmatprep.subr.mxu0 0.0
          %502 = vmatpush1.msra.mxu0 0.0
          %503 = vmatprep.subr.mxu0 0.0
          %504 = vmatpush1.msra.mxu0 0.0
          %505 = vmatprep.subr.mxu0 0.0
          %506 = vmatpush1.msra.mxu0 0.0
          %507 = vmatprep.subr.mxu0 0.0
          %508 = vmatpush1.msra.mxu0 0.0
          %509 = vmatprep.subr.mxu0 0.0
          %510 = vmatpush1.msra.mxu0 0.0
          %511 = vmatprep.subr.mxu0 0.0
          %512 = vmatpush1.msra.mxu0 0.0
          %513 = vmatprep.subr.mxu0 0.0
          %514 = vmatpush1.msra.mxu0 0.0
          %515 = vmatprep.subr.mxu0 0.0
          %516 = vmatpush1.msra.mxu0 0.0
          %517 = vmatprep.subr.mxu0 0.0
          %518 = vmatpush1.msra.mxu0 %v481
          %519 = vmatprep.subr.mxu0 0.0
          %520 = vmatpush1.msra.mxu0 %v480
          %521 = vmatprep.subr.mxu0 0.0
          %522 = vmatpush1.msra.mxu0 %v479
          %523 = vmatprep.subr.mxu0 0.0
          %524 = vmatpush1.msra.mxu0 %v478
          %525 = vmatprep.subr.mxu0 0.0
          %526 = vmatpush2.msra.mxu0 0.0
          %527 = vmatprep.subr.mxu0 0.0
          %528 = vmatpush2.msra.mxu0 0.0
          %529 = vmatprep.subr.mxu0 0.0
          %530 = vmatpush2.msra.mxu0 0.0
          %531 = vmatprep.subr.mxu0 0.0
          %532 = vmatpush2.msra.mxu0 0.0
          %533 = vmatprep.subr.mxu0 0.0
          %534 = vmatpush2.msra.mxu0 0.0
          %535 = vmatprep.subr.mxu0 0.0
          %536 = vmatpush2.msra.mxu0 0.0
          %537 = vmatprep.subr.mxu0 0.0
          %538 = vmatpush2.msra.mxu0 0.0
          %539 = vmatprep.subr.mxu0 0.0
          %540 = vmatpush2.msra.mxu0 0.0
          %541 = vmatprep.subr.mxu0 0.0
          %542 = vmatpush2.msra.mxu0 0.0
          %543 = vmatprep.subr.mxu0 0.0
          %544 = vmatpush2.msra.mxu0 0.0
          %545 = vmatprep.subr.mxu0 0.0
          %546 = vmatpush2.msra.mxu0 0.0
          %547 = vmatprep.subr.mxu0 0.0
          %548 = vmatpush2.msra.mxu0 0.0
          %549 = vmatprep.subr.mxu0 0.0
          %550 = vmatpush2.msra.mxu0 0.0
          %551 = vmatprep.subr.mxu0 0.0
          %552 = vmatpush2.msra.mxu0 0.0
          %553 = vmatprep.subr.mxu0 0.0
          %554 = vmatpush2.msra.mxu0 0.0
          %555 = vmatprep.subr.mxu0 0.0
          %556 = vmatpush2.msra.mxu0 0.0
          %557 = vmatprep.mubr.f32.mxu0 0.0
          %558 = vmatmul.mubr.f32.gmra.mxu0 %v491
          %v559 = vpop.f32.mrf.mxu0
          %v560 = vadd.f32 %v487, %v559
          %v561 = vpop.f32.mrf.mxu0
          %562 = vdwg.mxu0
          %564 = vrot.lane.b32.xlu0 %v560, 120
          %v565 = vpop.permute.xlu0 %564
          %567 = vrot.lane.b32.xlu0 %v560, 112
          %v568 = vpop.permute.xlu0 %567
          %570 = vrot.lane.b32.xlu0 %v560, 104
          %v571 = vpop.permute.xlu0 %570
          %v573 = vcombine.low %v560, %v568
          %v574 = vcombine.high %v560, %v568
          %v576 = vunpack.c.l.s4 1983009808
          %v577 = vunpack.c.0.s8 %v576
          %v578 = vlaneseq
          %v579 = vshrl.u32 %v578, 7
          %v580 = vsub.s32 %v577, %v579
          %v581 = vrot.slane %v573, %v580
          %v583 = vunpack.c.l.s4 1983009808
          %v584 = vunpack.c.0.s8 %v583
          %v585 = vlaneseq
          %v586 = vshrl.u32 %v585, 7
          %v587 = vsub.s32 %v584, %v586
          %v588 = vrot.slane %v574, %v587
          %v589 = vcombine.low %v565, %v571
          %v590 = vcombine.high %v565, %v571
          %v592 = vunpack.c.l.s4 1983009808
          %v593 = vunpack.c.0.s8 %v592
          %v594 = vlaneseq
          %v595 = vshrl.u32 %v594, 7
          %v596 = vsub.s32 %v593, %v595
          %v597 = vrot.slane %v589, %v596
          %v599 = vunpack.c.l.s4 1983009808
          %v600 = vunpack.c.0.s8 %v599
          %v601 = vlaneseq
          %v602 = vshrl.u32 %v601, 7
          %v603 = vsub.s32 %v600, %v602
          %v604 = vrot.slane %v590, %v603
          %v605 = vcombine.low %v581, %v597
          %v606 = vcombine.high %v581, %v597
          %v608 = vunpack.c.l.s4 1934713408
          %v609 = vunpack.c.0.s8 %v608
          %v610 = vlaneseq
          %v611 = vshrl.u32 %v610, 7
          %v612 = vsub.s32 %v609, %v611
          %v613 = vrot.slane %v605, %v612
          %v615 = vunpack.c.l.s4 1934713408
          %v616 = vunpack.c.0.s8 %v615
          %v617 = vlaneseq
          %v618 = vshrl.u32 %v617, 7
          %v619 = vsub.s32 %v616, %v618
          %v620 = vrot.slane %v606, %v619
          %v621 = vcombine.low %v588, %v604
          %v622 = vcombine.high %v588, %v604
          %v624 = vunpack.c.l.s4 1934713408
          %v625 = vunpack.c.0.s8 %v624
          %v626 = vlaneseq
          %v627 = vshrl.u32 %v626, 7
          %v628 = vsub.s32 %v625, %v627
          %v629 = vrot.slane %v621, %v628
          %v631 = vunpack.c.l.s4 1934713408
          %v632 = vunpack.c.0.s8 %v631
          %v633 = vlaneseq
          %v634 = vshrl.u32 %v633, 7
          %v635 = vsub.s32 %v632, %v634
          %v636 = vrot.slane %v622, %v635
          %v637 = vcombine.high %v613, 0.0
          %v638 = vcombine.high %v620, 0.0
          %v639 = vcombine.high %v629, 0.0
          %v640 = vcombine.high %v636, 0.0
          %641 = vrot.lane.b32.xlu0 %v560, 96
          %v642 = vpop.permute.xlu0 %641
          %643 = vrot.lane.b32.xlu0 %v565, 96
          %v644 = vpop.permute.xlu0 %643
          %645 = vrot.lane.b32.xlu0 %v568, 96
          %v646 = vpop.permute.xlu0 %645
          %647 = vrot.lane.b32.xlu0 %v571, 96
          %v648 = vpop.permute.xlu0 %647
          %v653 = vcombine.low %v642, %v646
          %v654 = vcombine.high %v642, %v646
          %v656 = vunpack.c.l.s4 1983009808
          %v657 = vunpack.c.0.s8 %v656
          %v658 = vlaneseq
          %v659 = vshrl.u32 %v658, 7
          %v660 = vsub.s32 %v657, %v659
          %v661 = vrot.slane %v653, %v660
          %v663 = vunpack.c.l.s4 1983009808
          %v664 = vunpack.c.0.s8 %v663
          %v665 = vlaneseq
          %v666 = vshrl.u32 %v665, 7
          %v667 = vsub.s32 %v664, %v666
          %v668 = vrot.slane %v654, %v667
          %v669 = vcombine.low %v644, %v648
          %v670 = vcombine.high %v644, %v648
          %v672 = vunpack.c.l.s4 1983009808
          %v673 = vunpack.c.0.s8 %v672
          %v674 = vlaneseq
          %v675 = vshrl.u32 %v674, 7
          %v676 = vsub.s32 %v673, %v675
          %v677 = vrot.slane %v669, %v676
          %v679 = vunpack.c.l.s4 1983009808
          %v680 = vunpack.c.0.s8 %v679
          %v681 = vlaneseq
          %v682 = vshrl.u32 %v681, 7
          %v683 = vsub.s32 %v680, %v682
          %v684 = vrot.slane %v670, %v683
          %v685 = vcombine.low %v661, %v677
          %v686 = vcombine.high %v661, %v677
          %v688 = vunpack.c.l.s4 1934713408
          %v689 = vunpack.c.0.s8 %v688
          %v690 = vlaneseq
          %v691 = vshrl.u32 %v690, 7
          %v692 = vsub.s32 %v689, %v691
          %v693 = vrot.slane %v685, %v692
          %v695 = vunpack.c.l.s4 1934713408
          %v696 = vunpack.c.0.s8 %v695
          %v697 = vlaneseq
          %v698 = vshrl.u32 %v697, 7
          %v699 = vsub.s32 %v696, %v698
          %v700 = vrot.slane %v686, %v699
          %v701 = vcombine.low %v668, %v684
          %v702 = vcombine.high %v668, %v684
          %v704 = vunpack.c.l.s4 1934713408
          %v705 = vunpack.c.0.s8 %v704
          %v706 = vlaneseq
          %v707 = vshrl.u32 %v706, 7
          %v708 = vsub.s32 %v705, %v707
          %v709 = vrot.slane %v701, %v708
          %v711 = vunpack.c.l.s4 1934713408
          %v712 = vunpack.c.0.s8 %v711
          %v713 = vlaneseq
          %v714 = vshrl.u32 %v713, 7
          %v715 = vsub.s32 %v712, %v714
          %v716 = vrot.slane %v702, %v715
          %v717 = vcombine.high %v693, 0.0
          %v718 = vcombine.high %v700, 0.0
          %v719 = vcombine.high %v709, 0.0
          %v720 = vcombine.high %v716, 0.0
          %v721 = vcombine.low %v613, %v620
          %v723 = vunpack.c.l.s4 1983009808
          %v724 = vunpack.c.0.s8 %v723
          %v725 = vlaneseq
          %v726 = vshrl.u32 %v725, 7
          %v727 = vsub.s32 %v724, %v726
          %v728 = vrot.slane %v721, %v727
          %v729 = vcombine.low %v637, %v638
          %v731 = vunpack.c.l.s4 1983009808
          %v732 = vunpack.c.0.s8 %v731
          %v733 = vlaneseq
          %v734 = vshrl.u32 %v733, 7
          %v735 = vsub.s32 %v732, %v734
          %v736 = vrot.slane %v729, %v735
          %v737 = vcombine.low %v629, %v636
          %v739 = vunpack.c.l.s4 1983009808
          %v740 = vunpack.c.0.s8 %v739
          %v741 = vlaneseq
          %v742 = vshrl.u32 %v741, 7
          %v743 = vsub.s32 %v740, %v742
          %v744 = vrot.slane %v737, %v743
          %v745 = vcombine.low %v639, %v640
          %v747 = vunpack.c.l.s4 1983009808
          %v748 = vunpack.c.0.s8 %v747
          %v749 = vlaneseq
          %v750 = vshrl.u32 %v749, 7
          %v751 = vsub.s32 %v748, %v750
          %v752 = vrot.slane %v745, %v751
          %v753 = vcombine.low %v728, %v736
          %v754 = vcombine.high %v728, %v736
          %v756 = vunpack.c.l.s4 1934713408
          %v757 = vunpack.c.0.s8 %v756
          %v758 = vlaneseq
          %v759 = vshrl.u32 %v758, 7
          %v760 = vsub.s32 %v757, %v759
          %v761 = vrot.slane %v753, %v760
          %v763 = vunpack.c.l.s4 1934713408
          %v764 = vunpack.c.0.s8 %v763
          %v765 = vlaneseq
          %v766 = vshrl.u32 %v765, 7
          %v767 = vsub.s32 %v764, %v766
          %v768 = vrot.slane %v754, %v767
          %v769 = vcombine.low %v744, %v752
          %v770 = vcombine.high %v744, %v752
          %v772 = vunpack.c.l.s4 1934713408
          %v773 = vunpack.c.0.s8 %v772
          %v774 = vlaneseq
          %v775 = vshrl.u32 %v774, 7
          %v776 = vsub.s32 %v773, %v775
          %v777 = vrot.slane %v769, %v776
          %v779 = vunpack.c.l.s4 1934713408
          %v780 = vunpack.c.0.s8 %v779
          %v781 = vlaneseq
          %v782 = vshrl.u32 %v781, 7
          %v783 = vsub.s32 %v780, %v782
          %v784 = vrot.slane %v770, %v783
          %v785 = vcombine.low %v761, %v777
          %v786 = vcombine.high %v761, %v777
          %v787 = vcombine.low %v768, %v784
          %v788 = vcombine.high %v768, %v784
          %vm789 = vcmask 64512
          %790 = vst.msk [vmem:[#allocation2] sm:$0xff] %vm789, %v785
          %791 = vst.msk [vmem:[#allocation2 + $0x8] sm:$0xff] %vm789, %v786
          %792 = vst.msk [vmem:[#allocation2 + $0x10] sm:$0xff] %vm789, %v787
          %793 = vst.msk [vmem:[#allocation2 + $0x18] sm:$0xff] %vm789, %v788
          %v794 = vcombine.low %v693, %v700
          %v796 = vunpack.c.l.s4 1983009808
          %v797 = vunpack.c.0.s8 %v796
          %v798 = vlaneseq
          %v799 = vshrl.u32 %v798, 7
          %v800 = vsub.s32 %v797, %v799
          %v801 = vrot.slane %v794, %v800
          %v802 = vcombine.low %v717, %v718
          %v804 = vunpack.c.l.s4 1983009808
          %v805 = vunpack.c.0.s8 %v804
          %v806 = vlaneseq
          %v807 = vshrl.u32 %v806, 7
          %v808 = vsub.s32 %v805, %v807
          %v809 = vrot.slane %v802, %v808
          %v810 = vcombine.low %v709, %v716
          %v812 = vunpack.c.l.s4 1983009808
          %v813 = vunpack.c.0.s8 %v812
          %v814 = vlaneseq
          %v815 = vshrl.u32 %v814, 7
          %v816 = vsub.s32 %v813, %v815
          %v817 = vrot.slane %v810, %v816
          %v818 = vcombine.low %v719, %v720
          %v820 = vunpack.c.l.s4 1983009808
          %v821 = vunpack.c.0.s8 %v820
          %v822 = vlaneseq
          %v823 = vshrl.u32 %v822, 7
          %v824 = vsub.s32 %v821, %v823
          %v825 = vrot.slane %v818, %v824
          %v826 = vcombine.low %v801, %v809
          %v827 = vcombine.high %v801, %v809
          %v829 = vunpack.c.l.s4 1934713408
          %v830 = vunpack.c.0.s8 %v829
          %v831 = vlaneseq
          %v832 = vshrl.u32 %v831, 7
          %v833 = vsub.s32 %v830, %v832
          %v834 = vrot.slane %v826, %v833
          %v836 = vunpack.c.l.s4 1934713408
          %v837 = vunpack.c.0.s8 %v836
          %v838 = vlaneseq
          %v839 = vshrl.u32 %v838, 7
          %v840 = vsub.s32 %v837, %v839
          %v841 = vrot.slane %v827, %v840
          %v842 = vcombine.low %v817, %v825
          %v843 = vcombine.high %v817, %v825
          %v845 = vunpack.c.l.s4 1934713408
          %v846 = vunpack.c.0.s8 %v845
          %v847 = vlaneseq
          %v848 = vshrl.u32 %v847, 7
          %v849 = vsub.s32 %v846, %v848
          %v850 = vrot.slane %v842, %v849
          %v852 = vunpack.c.l.s4 1934713408
          %v853 = vunpack.c.0.s8 %v852
          %v854 = vlaneseq
          %v855 = vshrl.u32 %v854, 7
          %v856 = vsub.s32 %v853, %v855
          %v857 = vrot.slane %v843, %v856
          %v858 = vcombine.low %v834, %v850
          %v859 = vcombine.high %v834, %v850
          %v860 = vcombine.low %v841, %v857
          %v861 = vcombine.high %v841, %v857
          %862 = vst.msk [vmem:[#allocation3] sm:$0xff] %vm789, %v858
          %863 = vst.msk [vmem:[#allocation3 + $0x8] sm:$0xff] %vm789, %v859
          %864 = vst.msk [vmem:[#allocation3 + $0x10] sm:$0xff] %vm789, %v860
          %865 = vst.msk [vmem:[#allocation3 + $0x18] sm:$0xff] %vm789, %v861
        $region84: #{tpu_custom_call.1} parent=59 // pred_fallthru
          _
        %v866 = vld [vmem:[#allocation9] sm:$0xff]
        %v867 = vld [vmem:[#allocation9 + $0x8] sm:$0xff]
        %v868 = vld [vmem:[#allocation9 + $0x10] sm:$0xff]
        %v869 = vld [vmem:[#allocation9 + $0x18] sm:$0xff]
        %v870 = vld [vmem:[%s3] sm:$0x1]
        %v872 = vlaneseq
        %v873 = vshrl.u32 %v872, 7
        %v874 = vsub.s32 0, %v873
        %v875 = vrot.slane %v870, %v874
        %vm877 = vcmask 261120
        %v879 = vsel %vm877, %v472, 0
        %881 = vmatprep.subr.mxu0 0.0
        %882 = vmatpush1.msra.mxu0 0.0
        %883 = vmatprep.subr.mxu0 0.0
        %884 = vmatpush1.msra.mxu0 0.0
        %885 = vmatprep.subr.mxu0 0.0
        %886 = vmatpush1.msra.mxu0 0.0
        %887 = vmatprep.subr.mxu0 0.0
        %888 = vmatpush1.msra.mxu0 0.0
        %889 = vmatprep.subr.mxu0 0.0
        %890 = vmatpush1.msra.mxu0 0.0
        %891 = vmatprep.subr.mxu0 0.0
        %892 = vmatpush1.msra.mxu0 0.0
        %893 = vmatprep.subr.mxu0 0.0
        %894 = vmatpush1.msra.mxu0 0.0
        %895 = vmatprep.subr.mxu0 0.0
        %896 = vmatpush1.msra.mxu0 0.0
        %897 = vmatprep.subr.mxu0 0.0
        %898 = vmatpush1.msra.mxu0 0.0
        %899 = vmatprep.subr.mxu0 0.0
        %900 = vmatpush1.msra.mxu0 0.0
        %901 = vmatprep.subr.mxu0 0.0
        %902 = vmatpush1.msra.mxu0 0.0
        %903 = vmatprep.subr.mxu0 0.0
        %904 = vmatpush1.msra.mxu0 0.0
        %905 = vmatprep.subr.mxu0 0.0
        %906 = vmatpush1.msra.mxu0 %v869
        %907 = vmatprep.subr.mxu0 0.0
        %908 = vmatpush1.msra.mxu0 %v868
        %909 = vmatprep.subr.mxu0 0.0
        %910 = vmatpush1.msra.mxu0 %v867
        %911 = vmatprep.subr.mxu0 0.0
        %912 = vmatpush1.msra.mxu0 %v866
        %913 = vmatprep.subr.mxu0 0.0
        %914 = vmatpush2.msra.mxu0 0.0
        %915 = vmatprep.subr.mxu0 0.0
        %916 = vmatpush2.msra.mxu0 0.0
        %917 = vmatprep.subr.mxu0 0.0
        %918 = vmatpush2.msra.mxu0 0.0
        %919 = vmatprep.subr.mxu0 0.0
        %920 = vmatpush2.msra.mxu0 0.0
        %921 = vmatprep.subr.mxu0 0.0
        %922 = vmatpush2.msra.mxu0 0.0
        %923 = vmatprep.subr.mxu0 0.0
        %924 = vmatpush2.msra.mxu0 0.0
        %925 = vmatprep.subr.mxu0 0.0
        %926 = vmatpush2.msra.mxu0 0.0
        %927 = vmatprep.subr.mxu0 0.0
        %928 = vmatpush2.msra.mxu0 0.0
        %929 = vmatprep.subr.mxu0 0.0
        %930 = vmatpush2.msra.mxu0 0.0
        %931 = vmatprep.subr.mxu0 0.0
        %932 = vmatpush2.msra.mxu0 0.0
        %933 = vmatprep.subr.mxu0 0.0
        %934 = vmatpush2.msra.mxu0 0.0
        %935 = vmatprep.subr.mxu0 0.0
        %936 = vmatpush2.msra.mxu0 0.0
        %937 = vmatprep.subr.mxu0 0.0
        %938 = vmatpush2.msra.mxu0 0.0
        %939 = vmatprep.subr.mxu0 0.0
        %940 = vmatpush2.msra.mxu0 0.0
        %941 = vmatprep.subr.mxu0 0.0
        %942 = vmatpush2.msra.mxu0 0.0
        %943 = vmatprep.subr.mxu0 0.0
        %944 = vmatpush2.msra.mxu0 0.0
        %945 = vmatprep.mubr.f32.mxu0 0.0
        %946 = vmatmul.mubr.f32.gmra.mxu0 %v879
        %v947 = vpop.f32.mrf.mxu0
        %v948 = vadd.f32 %v875, %v947
        %v949 = vpop.f32.mrf.mxu0
        %950 = vdwg.mxu0
        %v951 = vmul.f32 %v948, 0.35355338
        %953 = vrot.lane.b32.xlu0 %v951, 120
        %v954 = vpop.permute.xlu0 %953
        %956 = vrot.lane.b32.xlu0 %v951, 112
        %v957 = vpop.permute.xlu0 %956
        %959 = vrot.lane.b32.xlu0 %v951, 104
        %v960 = vpop.permute.xlu0 %959
        %v962 = vcombine.low %v951, %v957
        %v963 = vcombine.high %v951, %v957
        %v965 = vunpack.c.l.s4 1983009808
        %v966 = vunpack.c.0.s8 %v965
        %v967 = vlaneseq
        %v968 = vshrl.u32 %v967, 7
        %v969 = vsub.s32 %v966, %v968
        %v970 = vrot.slane %v962, %v969
        %v972 = vunpack.c.l.s4 1983009808
        %v973 = vunpack.c.0.s8 %v972
        %v974 = vlaneseq
        %v975 = vshrl.u32 %v974, 7
        %v976 = vsub.s32 %v973, %v975
        %v977 = vrot.slane %v963, %v976
        %v978 = vcombine.low %v954, %v960
        %v979 = vcombine.high %v954, %v960
        %v981 = vunpack.c.l.s4 1983009808
        %v982 = vunpack.c.0.s8 %v981
        %v983 = vlaneseq
        %v984 = vshrl.u32 %v983, 7
        %v985 = vsub.s32 %v982, %v984
        %v986 = vrot.slane %v978, %v985
        %v988 = vunpack.c.l.s4 1983009808
        %v989 = vunpack.c.0.s8 %v988
        %v990 = vlaneseq
        %v991 = vshrl.u32 %v990, 7
        %v992 = vsub.s32 %v989, %v991
        %v993 = vrot.slane %v979, %v992
        %v994 = vcombine.low %v970, %v986
        %v995 = vcombine.high %v970, %v986
        %v997 = vunpack.c.l.s4 1934713408
        %v998 = vunpack.c.0.s8 %v997
        %v999 = vlaneseq
        %v1000 = vshrl.u32 %v999, 7
        %v1001 = vsub.s32 %v998, %v1000
        %v1002 = vrot.slane %v994, %v1001
        %v1004 = vunpack.c.l.s4 1934713408
        %v1005 = vunpack.c.0.s8 %v1004
        %v1006 = vlaneseq
        %v1007 = vshrl.u32 %v1006, 7
        %v1008 = vsub.s32 %v1005, %v1007
        %v1009 = vrot.slane %v995, %v1008
        %v1010 = vcombine.low %v977, %v993
        %v1011 = vcombine.high %v977, %v993
        %v1013 = vunpack.c.l.s4 1934713408
        %v1014 = vunpack.c.0.s8 %v1013
        %v1015 = vlaneseq
        %v1016 = vshrl.u32 %v1015, 7
        %v1017 = vsub.s32 %v1014, %v1016
        %v1018 = vrot.slane %v1010, %v1017
        %v1020 = vunpack.c.l.s4 1934713408
        %v1021 = vunpack.c.0.s8 %v1020
        %v1022 = vlaneseq
        %v1023 = vshrl.u32 %v1022, 7
        %v1024 = vsub.s32 %v1021, %v1023
        %v1025 = vrot.slane %v1011, %v1024
        %v1026 = vcombine.high %v1002, 0.0
        %v1027 = vcombine.high %v1009, 0.0
        %v1028 = vcombine.high %v1018, 0.0
        %v1029 = vcombine.high %v1025, 0.0
        %v1030 = vcombine.low %v1002, %v1009
        %v1032 = vunpack.c.l.s4 1983009808
        %v1033 = vunpack.c.0.s8 %v1032
        %v1034 = vlaneseq
        %v1035 = vshrl.u32 %v1034, 7
        %v1036 = vsub.s32 %v1033, %v1035
        %v1037 = vrot.slane %v1030, %v1036
        %v1038 = vcombine.low %v1026, %v1027
        %v1040 = vunpack.c.l.s4 1983009808
        %v1041 = vunpack.c.0.s8 %v1040
        %v1042 = vlaneseq
        %v1043 = vshrl.u32 %v1042, 7
        %v1044 = vsub.s32 %v1041, %v1043
        %v1045 = vrot.slane %v1038, %v1044
        %v1046 = vcombine.low %v1018, %v1025
        %v1048 = vunpack.c.l.s4 1983009808
        %v1049 = vunpack.c.0.s8 %v1048
        %v1050 = vlaneseq
        %v1051 = vshrl.u32 %v1050, 7
        %v1052 = vsub.s32 %v1049, %v1051
        %v1053 = vrot.slane %v1046, %v1052
        %v1054 = vcombine.low %v1028, %v1029
        %v1056 = vunpack.c.l.s4 1983009808
        %v1057 = vunpack.c.0.s8 %v1056
        %v1058 = vlaneseq
        %v1059 = vshrl.u32 %v1058, 7
        %v1060 = vsub.s32 %v1057, %v1059
        %v1061 = vrot.slane %v1054, %v1060
        %v1062 = vcombine.low %v1037, %v1045
        %v1063 = vcombine.high %v1037, %v1045
        %v1065 = vunpack.c.l.s4 1934713408
        %v1066 = vunpack.c.0.s8 %v1065
        %v1067 = vlaneseq
        %v1068 = vshrl.u32 %v1067, 7
        %v1069 = vsub.s32 %v1066, %v1068
        %v1070 = vrot.slane %v1062, %v1069
        %v1072 = vunpack.c.l.s4 1934713408
        %v1073 = vunpack.c.0.s8 %v1072
        %v1074 = vlaneseq
        %v1075 = vshrl.u32 %v1074, 7
        %v1076 = vsub.s32 %v1073, %v1075
        %v1077 = vrot.slane %v1063, %v1076
        %v1078 = vcombine.low %v1053, %v1061
        %v1079 = vcombine.high %v1053, %v1061
        %v1081 = vunpack.c.l.s4 1934713408
        %v1082 = vunpack.c.0.s8 %v1081
        %v1083 = vlaneseq
        %v1084 = vshrl.u32 %v1083, 7
        %v1085 = vsub.s32 %v1082, %v1084
        %v1086 = vrot.slane %v1078, %v1085
        %v1088 = vunpack.c.l.s4 1934713408
        %v1089 = vunpack.c.0.s8 %v1088
        %v1090 = vlaneseq
        %v1091 = vshrl.u32 %v1090, 7
        %v1092 = vsub.s32 %v1089, %v1091
        %v1093 = vrot.slane %v1079, %v1092
        %v1094 = vcombine.low %v1070, %v1086
        %v1095 = vcombine.high %v1070, %v1086
        %v1096 = vcombine.low %v1077, %v1093
        %v1097 = vcombine.high %v1077, %v1093
        %v1098 = vld [vmem:[#allocation2] sm:$0xff]
        %v1099 = vld [vmem:[#allocation2 + $0x8] sm:$0xff]
        %v1100 = vld [vmem:[#allocation2 + $0x10] sm:$0xff]
        %v1101 = vld [vmem:[#allocation2 + $0x18] sm:$0xff]
        %v1102 = vld [vmem:[#allocation3] sm:$0xff]
        %v1103 = vld [vmem:[#allocation3 + $0x8] sm:$0xff]
        %v1104 = vld [vmem:[#allocation3 + $0x10] sm:$0xff]
        %v1105 = vld [vmem:[#allocation3 + $0x18] sm:$0xff]
        %vm1106 = vcmask 64512
        %v1108 = vsel %vm1106, %v1094, 0
        %v1111 = vsel %vm1106, %v1098, 0
        %1113 = vmatprep.subr.mxu0 0.0
        %1114 = vmatpush1.xpose.msra.mxu0 0.0
        %1115 = vmatprep.subr.mxu0 0.0
        %1116 = vmatpush1.xpose.msra.mxu0 0.0
        %1117 = vmatprep.subr.mxu0 0.0
        %1118 = vmatpush1.xpose.msra.mxu0 0.0
        %1119 = vmatprep.subr.mxu0 0.0
        %1120 = vmatpush1.xpose.msra.mxu0 0.0
        %1121 = vmatprep.subr.mxu0 0.0
        %1122 = vmatpush1.xpose.msra.mxu0 0.0
        %1123 = vmatprep.subr.mxu0 0.0
        %1124 = vmatpush1.xpose.msra.mxu0 0.0
        %1125 = vmatprep.subr.mxu0 0.0
        %1126 = vmatpush1.xpose.msra.mxu0 0.0
        %1127 = vmatprep.subr.mxu0 0.0
        %1128 = vmatpush1.xpose.msra.mxu0 0.0
        %1129 = vmatprep.subr.mxu0 0.0
        %1130 = vmatpush1.xpose.msra.mxu0 0.0
        %1131 = vmatprep.subr.mxu0 0.0
        %1132 = vmatpush1.xpose.msra.mxu0 0.0
        %1133 = vmatprep.subr.mxu0 0.0
        %1134 = vmatpush1.xpose.msra.mxu0 0.0
        %1135 = vmatprep.subr.mxu0 0.0
        %1136 = vmatpush1.xpose.msra.mxu0 0.0
        %1137 = vmatprep.subr.mxu0 0.0
        %1138 = vmatpush1.xpose.msra.mxu0 0.0
        %1139 = vmatprep.subr.mxu0 0.0
        %1140 = vmatpush1.xpose.msra.mxu0 0.0
        %1141 = vmatprep.subr.mxu0 0.0
        %1142 = vmatpush1.xpose.msra.mxu0 0.0
        %1143 = vmatprep.subr.mxu0 0.0
        %1144 = vmatpush1.xpose.msra.mxu0 %v1111
        %1145 = vmatprep.subr.mxu0 0.0
        %1146 = vmatpush2.xpose.msra.mxu0 0.0
        %1147 = vmatprep.subr.mxu0 0.0
        %1148 = vmatpush2.xpose.msra.mxu0 0.0
        %1149 = vmatprep.subr.mxu0 0.0
        %1150 = vmatpush2.xpose.msra.mxu0 0.0
        %1151 = vmatprep.subr.mxu0 0.0
        %1152 = vmatpush2.xpose.msra.mxu0 0.0
        %1153 = vmatprep.subr.mxu0 0.0
        %1154 = vmatpush2.xpose.msra.mxu0 0.0
        %1155 = vmatprep.subr.mxu0 0.0
        %1156 = vmatpush2.xpose.msra.mxu0 0.0
        %1157 = vmatprep.subr.mxu0 0.0
        %1158 = vmatpush2.xpose.msra.mxu0 0.0
        %1159 = vmatprep.subr.mxu0 0.0
        %1160 = vmatpush2.xpose.msra.mxu0 0.0
        %1161 = vmatprep.subr.mxu0 0.0
        %1162 = vmatpush2.xpose.msra.mxu0 0.0
        %1163 = vmatprep.subr.mxu0 0.0
        %1164 = vmatpush2.xpose.msra.mxu0 0.0
        %1165 = vmatprep.subr.mxu0 0.0
        %1166 = vmatpush2.xpose.msra.mxu0 0.0
        %1167 = vmatprep.subr.mxu0 0.0
        %1168 = vmatpush2.xpose.msra.mxu0 0.0
        %1169 = vmatprep.subr.mxu0 0.0
        %1170 = vmatpush2.xpose.msra.mxu0 0.0
        %1171 = vmatprep.subr.mxu0 0.0
        %1172 = vmatpush2.xpose.msra.mxu0 0.0
        %1173 = vmatprep.subr.mxu0 0.0
        %1174 = vmatpush2.xpose.msra.mxu0 0.0
        %1175 = vmatprep.subr.mxu0 0.0
        %1176 = vmatpush2.xpose.msra.mxu0 0.0
        %1177 = vmatprep.mubr.f32.mxu0 0.0
        %1178 = vmatmul.mubr.f32.gmra.mxu0 %v1108
        %v1179 = vpop.f32.mrf.mxu0
        %v1180 = vadd.f32 0.0, %v1179
        %v1181 = vpop.f32.mrf.mxu0
        %1182 = vdwg.mxu0
        %v1184 = vsel %vm1106, %v1095, 0
        %v1187 = vsel %vm1106, %v1099, 0
        %1189 = vmatprep.subr.mxu0 0.0
        %1190 = vmatpush1.xpose.msra.mxu0 0.0
        %1191 = vmatprep.subr.mxu0 0.0
        %1192 = vmatpush1.xpose.msra.mxu0 0.0
        %1193 = vmatprep.subr.mxu0 0.0
        %1194 = vmatpush1.xpose.msra.mxu0 0.0
        %1195 = vmatprep.subr.mxu0 0.0
        %1196 = vmatpush1.xpose.msra.mxu0 0.0
        %1197 = vmatprep.subr.mxu0 0.0
        %1198 = vmatpush1.xpose.msra.mxu0 0.0
        %1199 = vmatprep.subr.mxu0 0.0
        %1200 = vmatpush1.xpose.msra.mxu0 0.0
        %1201 = vmatprep.subr.mxu0 0.0
        %1202 = vmatpush1.xpose.msra.mxu0 0.0
        %1203 = vmatprep.subr.mxu0 0.0
        %1204 = vmatpush1.xpose.msra.mxu0 0.0
        %1205 = vmatprep.subr.mxu0 0.0
        %1206 = vmatpush1.xpose.msra.mxu0 0.0
        %1207 = vmatprep.subr.mxu0 0.0
        %1208 = vmatpush1.xpose.msra.mxu0 0.0
        %1209 = vmatprep.subr.mxu0 0.0
        %1210 = vmatpush1.xpose.msra.mxu0 0.0
        %1211 = vmatprep.subr.mxu0 0.0
        %1212 = vmatpush1.xpose.msra.mxu0 0.0
        %1213 = vmatprep.subr.mxu0 0.0
        %1214 = vmatpush1.xpose.msra.mxu0 0.0
        %1215 = vmatprep.subr.mxu0 0.0
        %1216 = vmatpush1.xpose.msra.mxu0 0.0
        %1217 = vmatprep.subr.mxu0 0.0
        %1218 = vmatpush1.xpose.msra.mxu0 0.0
        %1219 = vmatprep.subr.mxu0 0.0
        %1220 = vmatpush1.xpose.msra.mxu0 %v1187
        %1221 = vmatprep.subr.mxu0 0.0
        %1222 = vmatpush2.xpose.msra.mxu0 0.0
        %1223 = vmatprep.subr.mxu0 0.0
        %1224 = vmatpush2.xpose.msra.mxu0 0.0
        %1225 = vmatprep.subr.mxu0 0.0
        %1226 = vmatpush2.xpose.msra.mxu0 0.0
        %1227 = vmatprep.subr.mxu0 0.0
        %1228 = vmatpush2.xpose.msra.mxu0 0.0
        %1229 = vmatprep.subr.mxu0 0.0
        %1230 = vmatpush2.xpose.msra.mxu0 0.0
        %1231 = vmatprep.subr.mxu0 0.0
        %1232 = vmatpush2.xpose.msra.mxu0 0.0
        %1233 = vmatprep.subr.mxu0 0.0
        %1234 = vmatpush2.xpose.msra.mxu0 0.0
        %1235 = vmatprep.subr.mxu0 0.0
        %1236 = vmatpush2.xpose.msra.mxu0 0.0
        %1237 = vmatprep.subr.mxu0 0.0
        %1238 = vmatpush2.xpose.msra.mxu0 0.0
        %1239 = vmatprep.subr.mxu0 0.0
        %1240 = vmatpush2.xpose.msra.mxu0 0.0
        %1241 = vmatprep.subr.mxu0 0.0
        %1242 = vmatpush2.xpose.msra.mxu0 0.0
        %1243 = vmatprep.subr.mxu0 0.0
        %1244 = vmatpush2.xpose.msra.mxu0 0.0
        %1245 = vmatprep.subr.mxu0 0.0
        %1246 = vmatpush2.xpose.msra.mxu0 0.0
        %1247 = vmatprep.subr.mxu0 0.0
        %1248 = vmatpush2.xpose.msra.mxu0 0.0
        %1249 = vmatprep.subr.mxu0 0.0
        %1250 = vmatpush2.xpose.msra.mxu0 0.0
        %1251 = vmatprep.subr.mxu0 0.0
        %1252 = vmatpush2.xpose.msra.mxu0 0.0
        %1253 = vmatprep.mubr.f32.mxu0 0.0
        %1254 = vmatmul.mubr.f32.gmra.mxu0 %v1184
        %v1255 = vpop.f32.mrf.mxu0
        %v1256 = vadd.f32 0.0, %v1255
        %v1257 = vpop.f32.mrf.mxu0
        %1258 = vdwg.mxu0
        %v1260 = vsel %vm1106, %v1096, 0
        %v1263 = vsel %vm1106, %v1100, 0
        %1265 = vmatprep.subr.mxu0 0.0
        %1266 = vmatpush1.xpose.msra.mxu0 0.0
        %1267 = vmatprep.subr.mxu0 0.0
        %1268 = vmatpush1.xpose.msra.mxu0 0.0
        %1269 = vmatprep.subr.mxu0 0.0
        %1270 = vmatpush1.xpose.msra.mxu0 0.0
        %1271 = vmatprep.subr.mxu0 0.0
        %1272 = vmatpush1.xpose.msra.mxu0 0.0
        %1273 = vmatprep.subr.mxu0 0.0
        %1274 = vmatpush1.xpose.msra.mxu0 0.0
        %1275 = vmatprep.subr.mxu0 0.0
        %1276 = vmatpush1.xpose.msra.mxu0 0.0
        %1277 = vmatprep.subr.mxu0 0.0
        %1278 = vmatpush1.xpose.msra.mxu0 0.0
        %1279 = vmatprep.subr.mxu0 0.0
        %1280 = vmatpush1.xpose.msra.mxu0 0.0
        %1281 = vmatprep.subr.mxu0 0.0
        %1282 = vmatpush1.xpose.msra.mxu0 0.0
        %1283 = vmatprep.subr.mxu0 0.0
        %1284 = vmatpush1.xpose.msra.mxu0 0.0
        %1285 = vmatprep.subr.mxu0 0.0
        %1286 = vmatpush1.xpose.msra.mxu0 0.0
        %1287 = vmatprep.subr.mxu0 0.0
        %1288 = vmatpush1.xpose.msra.mxu0 0.0
        %1289 = vmatprep.subr.mxu0 0.0
        %1290 = vmatpush1.xpose.msra.mxu0 0.0
        %1291 = vmatprep.subr.mxu0 0.0
        %1292 = vmatpush1.xpose.msra.mxu0 0.0
        %1293 = vmatprep.subr.mxu0 0.0
        %1294 = vmatpush1.xpose.msra.mxu0 0.0
        %1295 = vmatprep.subr.mxu0 0.0
        %1296 = vmatpush1.xpose.msra.mxu0 %v1263
        %1297 = vmatprep.subr.mxu0 0.0
        %1298 = vmatpush2.xpose.msra.mxu0 0.0
        %1299 = vmatprep.subr.mxu0 0.0
        %1300 = vmatpush2.xpose.msra.mxu0 0.0
        %1301 = vmatprep.subr.mxu0 0.0
        %1302 = vmatpush2.xpose.msra.mxu0 0.0
        %1303 = vmatprep.subr.mxu0 0.0
        %1304 = vmatpush2.xpose.msra.mxu0 0.0
        %1305 = vmatprep.subr.mxu0 0.0
        %1306 = vmatpush2.xpose.msra.mxu0 0.0
        %1307 = vmatprep.subr.mxu0 0.0
        %1308 = vmatpush2.xpose.msra.mxu0 0.0
        %1309 = vmatprep.subr.mxu0 0.0
        %1310 = vmatpush2.xpose.msra.mxu0 0.0
        %1311 = vmatprep.subr.mxu0 0.0
        %1312 = vmatpush2.xpose.msra.mxu0 0.0
        %1313 = vmatprep.subr.mxu0 0.0
        %1314 = vmatpush2.xpose.msra.mxu0 0.0
        %1315 = vmatprep.subr.mxu0 0.0
        %1316 = vmatpush2.xpose.msra.mxu0 0.0
        %1317 = vmatprep.subr.mxu0 0.0
        %1318 = vmatpush2.xpose.msra.mxu0 0.0
        %1319 = vmatprep.subr.mxu0 0.0
        %1320 = vmatpush2.xpose.msra.mxu0 0.0
        %1321 = vmatprep.subr.mxu0 0.0
        %1322 = vmatpush2.xpose.msra.mxu0 0.0
        %1323 = vmatprep.subr.mxu0 0.0
        %1324 = vmatpush2.xpose.msra.mxu0 0.0
        %1325 = vmatprep.subr.mxu0 0.0
        %1326 = vmatpush2.xpose.msra.mxu0 0.0
        %1327 = vmatprep.subr.mxu0 0.0
        %1328 = vmatpush2.xpose.msra.mxu0 0.0
        %1329 = vmatprep.mubr.f32.mxu0 0.0
        %1330 = vmatmul.mubr.f32.gmra.mxu0 %v1260
        %v1331 = vpop.f32.mrf.mxu0
        %v1332 = vadd.f32 0.0, %v1331
        %v1333 = vpop.f32.mrf.mxu0
        %1334 = vdwg.mxu0
        %v1336 = vsel %vm1106, %v1097, 0
        %v1339 = vsel %vm1106, %v1101, 0
        %1341 = vmatprep.subr.mxu0 0.0
        %1342 = vmatpush1.xpose.msra.mxu0 0.0
        %1343 = vmatprep.subr.mxu0 0.0
        %1344 = vmatpush1.xpose.msra.mxu0 0.0
        %1345 = vmatprep.subr.mxu0 0.0
        %1346 = vmatpush1.xpose.msra.mxu0 0.0
        %1347 = vmatprep.subr.mxu0 0.0
        %1348 = vmatpush1.xpose.msra.mxu0 0.0
        %1349 = vmatprep.subr.mxu0 0.0
        %1350 = vmatpush1.xpose.msra.mxu0 0.0
        %1351 = vmatprep.subr.mxu0 0.0
        %1352 = vmatpush1.xpose.msra.mxu0 0.0
        %1353 = vmatprep.subr.mxu0 0.0
        %1354 = vmatpush1.xpose.msra.mxu0 0.0
        %1355 = vmatprep.subr.mxu0 0.0
        %1356 = vmatpush1.xpose.msra.mxu0 0.0
        %1357 = vmatprep.subr.mxu0 0.0
        %1358 = vmatpush1.xpose.msra.mxu0 0.0
        %1359 = vmatprep.subr.mxu0 0.0
        %1360 = vmatpush1.xpose.msra.mxu0 0.0
        %1361 = vmatprep.subr.mxu0 0.0
        %1362 = vmatpush1.xpose.msra.mxu0 0.0
        %1363 = vmatprep.subr.mxu0 0.0
        %1364 = vmatpush1.xpose.msra.mxu0 0.0
        %1365 = vmatprep.subr.mxu0 0.0
        %1366 = vmatpush1.xpose.msra.mxu0 0.0
        %1367 = vmatprep.subr.mxu0 0.0
        %1368 = vmatpush1.xpose.msra.mxu0 0.0
        %1369 = vmatprep.subr.mxu0 0.0
        %1370 = vmatpush1.xpose.msra.mxu0 0.0
        %1371 = vmatprep.subr.mxu0 0.0
        %1372 = vmatpush1.xpose.msra.mxu0 %v1339
        %1373 = vmatprep.subr.mxu0 0.0
        %1374 = vmatpush2.xpose.msra.mxu0 0.0
        %1375 = vmatprep.subr.mxu0 0.0
        %1376 = vmatpush2.xpose.msra.mxu0 0.0
        %1377 = vmatprep.subr.mxu0 0.0
        %1378 = vmatpush2.xpose.msra.mxu0 0.0
        %1379 = vmatprep.subr.mxu0 0.0
        %1380 = vmatpush2.xpose.msra.mxu0 0.0
        %1381 = vmatprep.subr.mxu0 0.0
        %1382 = vmatpush2.xpose.msra.mxu0 0.0
        %1383 = vmatprep.subr.mxu0 0.0
        %1384 = vmatpush2.xpose.msra.mxu0 0.0
        %1385 = vmatprep.subr.mxu0 0.0
        %1386 = vmatpush2.xpose.msra.mxu0 0.0
        %1387 = vmatprep.subr.mxu0 0.0
        %1388 = vmatpush2.xpose.msra.mxu0 0.0
        %1389 = vmatprep.subr.mxu0 0.0
        %1390 = vmatpush2.xpose.msra.mxu0 0.0
        %1391 = vmatprep.subr.mxu0 0.0
        %1392 = vmatpush2.xpose.msra.mxu0 0.0
        %1393 = vmatprep.subr.mxu0 0.0
        %1394 = vmatpush2.xpose.msra.mxu0 0.0
        %1395 = vmatprep.subr.mxu0 0.0
        %1396 = vmatpush2.xpose.msra.mxu0 0.0
        %1397 = vmatprep.subr.mxu0 0.0
        %1398 = vmatpush2.xpose.msra.mxu0 0.0
        %1399 = vmatprep.subr.mxu0 0.0
        %1400 = vmatpush2.xpose.msra.mxu0 0.0
        %1401 = vmatprep.subr.mxu0 0.0
        %1402 = vmatpush2.xpose.msra.mxu0 0.0
        %1403 = vmatprep.subr.mxu0 0.0
        %1404 = vmatpush2.xpose.msra.mxu0 0.0
        %1405 = vmatprep.mubr.f32.mxu0 0.0
        %1406 = vmatmul.mubr.f32.gmra.mxu0 %v1336
        %v1407 = vpop.f32.mrf.mxu0
        %v1408 = vadd.f32 0.0, %v1407
        %v1409 = vpop.f32.mrf.mxu0
        %1410 = vdwg.mxu0
        %v1411 = vsel %vm1106, %v1180, -inf
        %1412 = vmax.xlane.f32.xlu0 %v1411
        %v1413 = vpop.xlane.xlu0 %1412
        %v1414 = vsel %vm1106, %v1256, -inf
        %1415 = vmax.xlane.f32.xlu0 %v1414
        %v1416 = vpop.xlane.xlu0 %1415
        %v1417 = vsel %vm1106, %v1332, -inf
        %1418 = vmax.xlane.f32.xlu0 %v1417
        %v1419 = vpop.xlane.xlu0 %1418
        %v1420 = vsel %vm1106, %v1408, -inf
        %1421 = vmax.xlane.f32.xlu0 %v1420
        %v1422 = vpop.xlane.xlu0 %1421
        %v1423 = vsub.f32 -inf, %v1413
        %v1424 = vsub.f32 -inf, %v1416
        %v1425 = vsub.f32 -inf, %v1419
        %v1426 = vsub.f32 -inf, %v1422
        %v1427 = vmul.f32 %v1423, 1.442695
        %v1428 = vpow.pop %v1427
        %v1429 = vmul.f32 %v1424, 1.442695
        %v1430 = vpow.pop %v1429
        %v1431 = vmul.f32 %v1425, 1.442695
        %v1432 = vpow.pop %v1431
        %v1433 = vmul.f32 %v1426, 1.442695
        %v1434 = vpow.pop %v1433
        %v1435 = vsub.f32 %v1180, %v1413
        %v1436 = vsub.f32 %v1256, %v1416
        %v1437 = vsub.f32 %v1332, %v1419
        %v1438 = vsub.f32 %v1408, %v1422
        %v1439 = vmul.f32 %v1435, 1.442695
        %v1440 = vpow.pop %v1439
        %v1441 = vmul.f32 %v1436, 1.442695
        %v1442 = vpow.pop %v1441
        %v1443 = vmul.f32 %v1437, 1.442695
        %v1444 = vpow.pop %v1443
        %v1445 = vmul.f32 %v1438, 1.442695
        %v1446 = vpow.pop %v1445
        %v1447 = vmul.f32 %v1428, 0.0
        %v1448 = vmul.f32 %v1430, 0.0
        %v1449 = vmul.f32 %v1432, 0.0
        %v1450 = vmul.f32 %v1434, 0.0
        %v1451 = vsel %vm1106, %v1440, 0.0
        %1452 = vadd.xlane.f32.xlu0 %v1451
        %v1453 = vpop.xlane.xlu0 %1452
        %v1454 = vsel %vm1106, %v1442, 0.0
        %1455 = vadd.xlane.f32.xlu0 %v1454
        %v1456 = vpop.xlane.xlu0 %1455
        %v1457 = vsel %vm1106, %v1444, 0.0
        %1458 = vadd.xlane.f32.xlu0 %v1457
        %v1459 = vpop.xlane.xlu0 %1458
        %v1460 = vsel %vm1106, %v1446, 0.0
        %1461 = vadd.xlane.f32.xlu0 %v1460
        %v1462 = vpop.xlane.xlu0 %1461
        %v1463 = vadd.f32 %v1447, %v1453
        %v1464 = vadd.f32 %v1448, %v1456
        %v1465 = vadd.f32 %v1449, %v1459
        %v1466 = vadd.f32 %v1450, %v1462
        %v1468 = vsel %vm1106, %v1440, 0
        %1470 = vmatprep.subr.mxu0 0.0
        %1471 = vmatpush1.msra.mxu0 0.0
        %1472 = vmatprep.subr.mxu0 0.0
        %1473 = vmatpush1.msra.mxu0 0.0
        %1474 = vmatprep.subr.mxu0 0.0
        %1475 = vmatpush1.msra.mxu0 0.0
        %1476 = vmatprep.subr.mxu0 0.0
        %1477 = vmatpush1.msra.mxu0 0.0
        %1478 = vmatprep.subr.mxu0 0.0
        %1479 = vmatpush1.msra.mxu0 0.0
        %1480 = vmatprep.subr.mxu0 0.0
        %1481 = vmatpush1.msra.mxu0 0.0
        %1482 = vmatprep.subr.mxu0 0.0
        %1483 = vmatpush1.msra.mxu0 0.0
        %1484 = vmatprep.subr.mxu0 0.0
        %1485 = vmatpush1.msra.mxu0 0.0
        %1486 = vmatprep.subr.mxu0 0.0
        %1487 = vmatpush1.msra.mxu0 0.0
        %1488 = vmatprep.subr.mxu0 0.0
        %1489 = vmatpush1.msra.mxu0 0.0
        %1490 = vmatprep.subr.mxu0 0.0
        %1491 = vmatpush1.msra.mxu0 0.0
        %1492 = vmatprep.subr.mxu0 0.0
        %1493 = vmatpush1.msra.mxu0 0.0
        %1494 = vmatprep.subr.mxu0 0.0
        %1495 = vmatpush1.msra.mxu0 0.0
        %1496 = vmatprep.subr.mxu0 0.0
        %1497 = vmatpush1.msra.mxu0 0.0
        %1498 = vmatprep.subr.mxu0 0.0
        %1499 = vmatpush1.msra.mxu0 0.0
        %1500 = vmatprep.subr.mxu0 0.0
        %1501 = vmatpush1.msra.mxu0 %v1102
        %1502 = vmatprep.subr.mxu0 0.0
        %1503 = vmatpush2.msra.mxu0 0.0
        %1504 = vmatprep.subr.mxu0 0.0
        %1505 = vmatpush2.msra.mxu0 0.0
        %1506 = vmatprep.subr.mxu0 0.0
        %1507 = vmatpush2.msra.mxu0 0.0
        %1508 = vmatprep.subr.mxu0 0.0
        %1509 = vmatpush2.msra.mxu0 0.0
        %1510 = vmatprep.subr.mxu0 0.0
        %1511 = vmatpush2.msra.mxu0 0.0
        %1512 = vmatprep.subr.mxu0 0.0
        %1513 = vmatpush2.msra.mxu0 0.0
        %1514 = vmatprep.subr.mxu0 0.0
        %1515 = vmatpush2.msra.mxu0 0.0
        %1516 = vmatprep.subr.mxu0 0.0
        %1517 = vmatpush2.msra.mxu0 0.0
        %1518 = vmatprep.subr.mxu0 0.0
        %1519 = vmatpush2.msra.mxu0 0.0
        %1520 = vmatprep.subr.mxu0 0.0
        %1521 = vmatpush2.msra.mxu0 0.0
        %1522 = vmatprep.subr.mxu0 0.0
        %1523 = vmatpush2.msra.mxu0 0.0
        %1524 = vmatprep.subr.mxu0 0.0
        %1525 = vmatpush2.msra.mxu0 0.0
        %1526 = vmatprep.subr.mxu0 0.0
        %1527 = vmatpush2.msra.mxu0 0.0
        %1528 = vmatprep.subr.mxu0 0.0
        %1529 = vmatpush2.msra.mxu0 0.0
        %1530 = vmatprep.subr.mxu0 0.0
        %1531 = vmatpush2.msra.mxu0 0.0
        %1532 = vmatprep.subr.mxu0 0.0
        %1533 = vmatpush2.msra.mxu0 0.0
        %1534 = vmatprep.mubr.f32.mxu0 0.0
        %1535 = vmatmul.mubr.f32.gmra.mxu0 %v1468
        %v1536 = vpop.f32.mrf.mxu0
        %v1537 = vadd.f32 0.0, %v1536
        %v1538 = vpop.f32.mrf.mxu0
        %1539 = vdwg.mxu0
        %v1541 = vsel %vm1106, %v1442, 0
        %1543 = vmatprep.subr.mxu0 0.0
        %1544 = vmatpush1.msra.mxu0 0.0
        %1545 = vmatprep.subr.mxu0 0.0
        %1546 = vmatpush1.msra.mxu0 0.0
        %1547 = vmatprep.subr.mxu0 0.0
        %1548 = vmatpush1.msra.mxu0 0.0
        %1549 = vmatprep.subr.mxu0 0.0
        %1550 = vmatpush1.msra.mxu0 0.0
        %1551 = vmatprep.subr.mxu0 0.0
        %1552 = vmatpush1.msra.mxu0 0.0
        %1553 = vmatprep.subr.mxu0 0.0
        %1554 = vmatpush1.msra.mxu0 0.0
        %1555 = vmatprep.subr.mxu0 0.0
        %1556 = vmatpush1.msra.mxu0 0.0
        %1557 = vmatprep.subr.mxu0 0.0
        %1558 = vmatpush1.msra.mxu0 0.0
        %1559 = vmatprep.subr.mxu0 0.0
        %1560 = vmatpush1.msra.mxu0 0.0
        %1561 = vmatprep.subr.mxu0 0.0
        %1562 = vmatpush1.msra.mxu0 0.0
        %1563 = vmatprep.subr.mxu0 0.0
        %1564 = vmatpush1.msra.mxu0 0.0
        %1565 = vmatprep.subr.mxu0 0.0
        %1566 = vmatpush1.msra.mxu0 0.0
        %1567 = vmatprep.subr.mxu0 0.0
        %1568 = vmatpush1.msra.mxu0 0.0
        %1569 = vmatprep.subr.mxu0 0.0
        %1570 = vmatpush1.msra.mxu0 0.0
        %1571 = vmatprep.subr.mxu0 0.0
        %1572 = vmatpush1.msra.mxu0 0.0
        %1573 = vmatprep.subr.mxu0 0.0
        %1574 = vmatpush1.msra.mxu0 %v1103
        %1575 = vmatprep.subr.mxu0 0.0
        %1576 = vmatpush2.msra.mxu0 0.0
        %1577 = vmatprep.subr.mxu0 0.0
        %1578 = vmatpush2.msra.mxu0 0.0
        %1579 = vmatprep.subr.mxu0 0.0
        %1580 = vmatpush2.msra.mxu0 0.0
        %1581 = vmatprep.subr.mxu0 0.0
        %1582 = vmatpush2.msra.mxu0 0.0
        %1583 = vmatprep.subr.mxu0 0.0
        %1584 = vmatpush2.msra.mxu0 0.0
        %1585 = vmatprep.subr.mxu0 0.0
        %1586 = vmatpush2.msra.mxu0 0.0
        %1587 = vmatprep.subr.mxu0 0.0
        %1588 = vmatpush2.msra.mxu0 0.0
        %1589 = vmatprep.subr.mxu0 0.0
        %1590 = vmatpush2.msra.mxu0 0.0
        %1591 = vmatprep.subr.mxu0 0.0
        %1592 = vmatpush2.msra.mxu0 0.0
        %1593 = vmatprep.subr.mxu0 0.0
        %1594 = vmatpush2.msra.mxu0 0.0
        %1595 = vmatprep.subr.mxu0 0.0
        %1596 = vmatpush2.msra.mxu0 0.0
        %1597 = vmatprep.subr.mxu0 0.0
        %1598 = vmatpush2.msra.mxu0 0.0
        %1599 = vmatprep.subr.mxu0 0.0
        %1600 = vmatpush2.msra.mxu0 0.0
        %1601 = vmatprep.subr.mxu0 0.0
        %1602 = vmatpush2.msra.mxu0 0.0
        %1603 = vmatprep.subr.mxu0 0.0
        %1604 = vmatpush2.msra.mxu0 0.0
        %1605 = vmatprep.subr.mxu0 0.0
        %1606 = vmatpush2.msra.mxu0 0.0
        %1607 = vmatprep.mubr.f32.mxu0 0.0
        %1608 = vmatmul.mubr.f32.gmra.mxu0 %v1541
        %v1609 = vpop.f32.mrf.mxu0
        %v1610 = vadd.f32 0.0, %v1609
        %v1611 = vpop.f32.mrf.mxu0
        %1612 = vdwg.mxu0
        %v1614 = vsel %vm1106, %v1444, 0
        %1616 = vmatprep.subr.mxu0 0.0
        %1617 = vmatpush1.msra.mxu0 0.0
        %1618 = vmatprep.subr.mxu0 0.0
        %1619 = vmatpush1.msra.mxu0 0.0
        %1620 = vmatprep.subr.mxu0 0.0
        %1621 = vmatpush1.msra.mxu0 0.0
        %1622 = vmatprep.subr.mxu0 0.0
        %1623 = vmatpush1.msra.mxu0 0.0
        %1624 = vmatprep.subr.mxu0 0.0
        %1625 = vmatpush1.msra.mxu0 0.0
        %1626 = vmatprep.subr.mxu0 0.0
        %1627 = vmatpush1.msra.mxu0 0.0
        %1628 = vmatprep.subr.mxu0 0.0
        %1629 = vmatpush1.msra.mxu0 0.0
        %1630 = vmatprep.subr.mxu0 0.0
        %1631 = vmatpush1.msra.mxu0 0.0
        %1632 = vmatprep.subr.mxu0 0.0
        %1633 = vmatpush1.msra.mxu0 0.0
        %1634 = vmatprep.subr.mxu0 0.0
        %1635 = vmatpush1.msra.mxu0 0.0
        %1636 = vmatprep.subr.mxu0 0.0
        %1637 = vmatpush1.msra.mxu0 0.0
        %1638 = vmatprep.subr.mxu0 0.0
        %1639 = vmatpush1.msra.mxu0 0.0
        %1640 = vmatprep.subr.mxu0 0.0
        %1641 = vmatpush1.msra.mxu0 0.0
        %1642 = vmatprep.subr.mxu0 0.0
        %1643 = vmatpush1.msra.mxu0 0.0
        %1644 = vmatprep.subr.mxu0 0.0
        %1645 = vmatpush1.msra.mxu0 0.0
        %1646 = vmatprep.subr.mxu0 0.0
        %1647 = vmatpush1.msra.mxu0 %v1104
        %1648 = vmatprep.subr.mxu0 0.0
        %1649 = vmatpush2.msra.mxu0 0.0
        %1650 = vmatprep.subr.mxu0 0.0
        %1651 = vmatpush2.msra.mxu0 0.0
        %1652 = vmatprep.subr.mxu0 0.0
        %1653 = vmatpush2.msra.mxu0 0.0
        %1654 = vmatprep.subr.mxu0 0.0
        %1655 = vmatpush2.msra.mxu0 0.0
        %1656 = vmatprep.subr.mxu0 0.0
        %1657 = vmatpush2.msra.mxu0 0.0
        %1658 = vmatprep.subr.mxu0 0.0
        %1659 = vmatpush2.msra.mxu0 0.0
        %1660 = vmatprep.subr.mxu0 0.0
        %1661 = vmatpush2.msra.mxu0 0.0
        %1662 = vmatprep.subr.mxu0 0.0
        %1663 = vmatpush2.msra.mxu0 0.0
        %1664 = vmatprep.subr.mxu0 0.0
        %1665 = vmatpush2.msra.mxu0 0.0
        %1666 = vmatprep.subr.mxu0 0.0
        %1667 = vmatpush2.msra.mxu0 0.0
        %1668 = vmatprep.subr.mxu0 0.0
        %1669 = vmatpush2.msra.mxu0 0.0
        %1670 = vmatprep.subr.mxu0 0.0
        %1671 = vmatpush2.msra.mxu0 0.0
        %1672 = vmatprep.subr.mxu0 0.0
        %1673 = vmatpush2.msra.mxu0 0.0
        %1674 = vmatprep.subr.mxu0 0.0
        %1675 = vmatpush2.msra.mxu0 0.0
        %1676 = vmatprep.subr.mxu0 0.0
        %1677 = vmatpush2.msra.mxu0 0.0
        %1678 = vmatprep.subr.mxu0 0.0
        %1679 = vmatpush2.msra.mxu0 0.0
        %1680 = vmatprep.mubr.f32.mxu0 0.0
        %1681 = vmatmul.mubr.f32.gmra.mxu0 %v1614
        %v1682 = vpop.f32.mrf.mxu0
        %v1683 = vadd.f32 0.0, %v1682
        %v1684 = vpop.f32.mrf.mxu0
        %1685 = vdwg.mxu0
        %v1687 = vsel %vm1106, %v1446, 0
        %1689 = vmatprep.subr.mxu0 0.0
        %1690 = vmatpush1.msra.mxu0 0.0
        %1691 = vmatprep.subr.mxu0 0.0
        %1692 = vmatpush1.msra.mxu0 0.0
        %1693 = vmatprep.subr.mxu0 0.0
        %1694 = vmatpush1.msra.mxu0 0.0
        %1695 = vmatprep.subr.mxu0 0.0
        %1696 = vmatpush1.msra.mxu0 0.0
        %1697 = vmatprep.subr.mxu0 0.0
        %1698 = vmatpush1.msra.mxu0 0.0
        %1699 = vmatprep.subr.mxu0 0.0
        %1700 = vmatpush1.msra.mxu0 0.0
        %1701 = vmatprep.subr.mxu0 0.0
        %1702 = vmatpush1.msra.mxu0 0.0
        %1703 = vmatprep.subr.mxu0 0.0
        %1704 = vmatpush1.msra.mxu0 0.0
        %1705 = vmatprep.subr.mxu0 0.0
        %1706 = vmatpush1.msra.mxu0 0.0
        %1707 = vmatprep.subr.mxu0 0.0
        %1708 = vmatpush1.msra.mxu0 0.0
        %1709 = vmatprep.subr.mxu0 0.0
        %1710 = vmatpush1.msra.mxu0 0.0
        %1711 = vmatprep.subr.mxu0 0.0
        %1712 = vmatpush1.msra.mxu0 0.0
        %1713 = vmatprep.subr.mxu0 0.0
        %1714 = vmatpush1.msra.mxu0 0.0
        %1715 = vmatprep.subr.mxu0 0.0
        %1716 = vmatpush1.msra.mxu0 0.0
        %1717 = vmatprep.subr.mxu0 0.0
        %1718 = vmatpush1.msra.mxu0 0.0
        %1719 = vmatprep.subr.mxu0 0.0
        %1720 = vmatpush1.msra.mxu0 %v1105
        %1721 = vmatprep.subr.mxu0 0.0
        %1722 = vmatpush2.msra.mxu0 0.0
        %1723 = vmatprep.subr.mxu0 0.0
        %1724 = vmatpush2.msra.mxu0 0.0
        %1725 = vmatprep.subr.mxu0 0.0
        %1726 = vmatpush2.msra.mxu0 0.0
        %1727 = vmatprep.subr.mxu0 0.0
        %1728 = vmatpush2.msra.mxu0 0.0
        %1729 = vmatprep.subr.mxu0 0.0
        %1730 = vmatpush2.msra.mxu0 0.0
        %1731 = vmatprep.subr.mxu0 0.0
        %1732 = vmatpush2.msra.mxu0 0.0
        %1733 = vmatprep.subr.mxu0 0.0
        %1734 = vmatpush2.msra.mxu0 0.0
        %1735 = vmatprep.subr.mxu0 0.0
        %1736 = vmatpush2.msra.mxu0 0.0
        %1737 = vmatprep.subr.mxu0 0.0
        %1738 = vmatpush2.msra.mxu0 0.0
        %1739 = vmatprep.subr.mxu0 0.0
        %1740 = vmatpush2.msra.mxu0 0.0
        %1741 = vmatprep.subr.mxu0 0.0
        %1742 = vmatpush2.msra.mxu0 0.0
        %1743 = vmatprep.subr.mxu0 0.0
        %1744 = vmatpush2.msra.mxu0 0.0
        %1745 = vmatprep.subr.mxu0 0.0
        %1746 = vmatpush2.msra.mxu0 0.0
        %1747 = vmatprep.subr.mxu0 0.0
        %1748 = vmatpush2.msra.mxu0 0.0
        %1749 = vmatprep.subr.mxu0 0.0
        %1750 = vmatpush2.msra.mxu0 0.0
        %1751 = vmatprep.subr.mxu0 0.0
        %1752 = vmatpush2.msra.mxu0 0.0
        %1753 = vmatprep.mubr.f32.mxu0 0.0
        %1754 = vmatmul.mubr.f32.gmra.mxu0 %v1687
        %v1755 = vpop.f32.mrf.mxu0
        %v1756 = vadd.f32 0.0, %v1755
        %v1757 = vpop.f32.mrf.mxu0
        %1758 = vdwg.mxu0
        %v1759 = vadd.f32 %v1447, %v1537
        %v1760 = vadd.f32 %v1448, %v1610
        %v1761 = vadd.f32 %v1449, %v1683
        %v1762 = vadd.f32 %v1450, %v1756
        %v1763 = vrcp.pop %v1463
        %v1764 = vrcp.pop %v1464
        %v1765 = vrcp.pop %v1465
        %v1766 = vrcp.pop %v1466
        %v1767 = vmul.f32 %v1759, %v1763
        %v1768 = vmul.f32 %v1760, %v1764
        %v1769 = vmul.f32 %v1761, %v1765
        %v1770 = vmul.f32 %v1762, %v1766
        %v1771 = vcombine.low %v1767, %v1769
        %v1772 = vcombine.high %v1767, %v1769
        %v1774 = vunpack.c.l.s4 1983009808
        %v1775 = vunpack.c.0.s8 %v1774
        %v1776 = vlaneseq
        %v1777 = vshrl.u32 %v1776, 7
        %v1778 = vsub.s32 %v1775, %v1777
        %v1779 = vrot.slane %v1771, %v1778
        %v1781 = vunpack.c.l.s4 1983009808
        %v1782 = vunpack.c.0.s8 %v1781
        %v1783 = vlaneseq
        %v1784 = vshrl.u32 %v1783, 7
        %v1785 = vsub.s32 %v1782, %v1784
        %v1786 = vrot.slane %v1772, %v1785
        %v1787 = vcombine.low %v1768, %v1770
        %v1788 = vcombine.high %v1768, %v1770
        %v1790 = vunpack.c.l.s4 1983009808
        %v1791 = vunpack.c.0.s8 %v1790
        %v1792 = vlaneseq
        %v1793 = vshrl.u32 %v1792, 7
        %v1794 = vsub.s32 %v1791, %v1793
        %v1795 = vrot.slane %v1787, %v1794
        %v1797 = vunpack.c.l.s4 1983009808
        %v1798 = vunpack.c.0.s8 %v1797
        %v1799 = vlaneseq
        %v1800 = vshrl.u32 %v1799, 7
        %v1801 = vsub.s32 %v1798, %v1800
        %v1802 = vrot.slane %v1788, %v1801
        %v1803 = vcombine.low %v1779, %v1795
        %v1804 = vcombine.high %v1779, %v1795
        %v1806 = vunpack.c.l.s4 1934713408
        %v1807 = vunpack.c.0.s8 %v1806
        %v1808 = vlaneseq
        %v1809 = vshrl.u32 %v1808, 7
        %v1810 = vsub.s32 %v1807, %v1809
        %v1811 = vrot.slane %v1803, %v1810
        %v1813 = vunpack.c.l.s4 1934713408
        %v1814 = vunpack.c.0.s8 %v1813
        %v1815 = vlaneseq
        %v1816 = vshrl.u32 %v1815, 7
        %v1817 = vsub.s32 %v1814, %v1816
        %v1818 = vrot.slane %v1804, %v1817
        %v1819 = vcombine.low %v1786, %v1802
        %v1820 = vcombine.high %v1786, %v1802
        %v1822 = vunpack.c.l.s4 1934713408
        %v1823 = vunpack.c.0.s8 %v1822
        %v1824 = vlaneseq
        %v1825 = vshrl.u32 %v1824, 7
        %v1826 = vsub.s32 %v1823, %v1825
        %v1827 = vrot.slane %v1819, %v1826
        %v1829 = vunpack.c.l.s4 1934713408
        %v1830 = vunpack.c.0.s8 %v1829
        %v1831 = vlaneseq
        %v1832 = vshrl.u32 %v1831, 7
        %v1833 = vsub.s32 %v1830, %v1832
        %v1834 = vrot.slane %v1820, %v1833
        %v1835 = vcombine.high %v1811, 0.0
        %v1836 = vcombine.high %v1818, 0.0
        %v1837 = vcombine.high %v1827, 0.0
        %v1838 = vcombine.high %v1834, 0.0
        %v1839 = vcombine.low %v1811, %v1818
        %v1841 = vunpack.c.l.s4 1983009808
        %v1842 = vunpack.c.0.s8 %v1841
        %v1843 = vlaneseq
        %v1844 = vshrl.u32 %v1843, 7
        %v1845 = vsub.s32 %v1842, %v1844
        %v1846 = vrot.slane %v1839, %v1845
        %v1847 = vcombine.low %v1835, %v1836
        %v1849 = vunpack.c.l.s4 1983009808
        %v1850 = vunpack.c.0.s8 %v1849
        %v1851 = vlaneseq
        %v1852 = vshrl.u32 %v1851, 7
        %v1853 = vsub.s32 %v1850, %v1852
        %v1854 = vrot.slane %v1847, %v1853
        %v1855 = vcombine.low %v1827, %v1834
        %v1857 = vunpack.c.l.s4 1983009808
        %v1858 = vunpack.c.0.s8 %v1857
        %v1859 = vlaneseq
        %v1860 = vshrl.u32 %v1859, 7
        %v1861 = vsub.s32 %v1858, %v1860
        %v1862 = vrot.slane %v1855, %v1861
        %v1863 = vcombine.low %v1837, %v1838
        %v1865 = vunpack.c.l.s4 1983009808
        %v1866 = vunpack.c.0.s8 %v1865
        %v1867 = vlaneseq
        %v1868 = vshrl.u32 %v1867, 7
        %v1869 = vsub.s32 %v1866, %v1868
        %v1870 = vrot.slane %v1863, %v1869
        %v1871 = vcombine.low %v1846, %v1854
        %v1872 = vcombine.high %v1846, %v1854
        %v1874 = vunpack.c.l.s4 1934713408
        %v1875 = vunpack.c.0.s8 %v1874
        %v1876 = vlaneseq
        %v1877 = vshrl.u32 %v1876, 7
        %v1878 = vsub.s32 %v1875, %v1877
        %v1879 = vrot.slane %v1871, %v1878
        %v1881 = vunpack.c.l.s4 1934713408
        %v1882 = vunpack.c.0.s8 %v1881
        %v1883 = vlaneseq
        %v1884 = vshrl.u32 %v1883, 7
        %v1885 = vsub.s32 %v1882, %v1884
        %v1886 = vrot.slane %v1872, %v1885
        %v1887 = vcombine.low %v1862, %v1870
        %v1888 = vcombine.high %v1862, %v1870
        %v1890 = vunpack.c.l.s4 1934713408
        %v1891 = vunpack.c.0.s8 %v1890
        %v1892 = vlaneseq
        %v1893 = vshrl.u32 %v1892, 7
        %v1894 = vsub.s32 %v1891, %v1893
        %v1895 = vrot.slane %v1887, %v1894
        %v1897 = vunpack.c.l.s4 1934713408
        %v1898 = vunpack.c.0.s8 %v1897
        %v1899 = vlaneseq
        %v1900 = vshrl.u32 %v1899, 7
        %v1901 = vsub.s32 %v1898, %v1900
        %v1902 = vrot.slane %v1888, %v1901
        %v1903 = vcombine.low %v1879, %v1895
        %v1904 = vcombine.high %v1879, %v1895
        %v1905 = vcombine.low %v1886, %v1902
        %v1906 = vcombine.high %v1886, %v1902
        %1908 = vrot.lane.b32.xlu0 %v1904, 8
        %v1909 = vpop.permute.xlu0 %1908
        %1912 = vrot.lane.b32.xlu0 %v1905, 16
        %v1913 = vpop.permute.xlu0 %1912
        %1916 = vrot.lane.b32.xlu0 %v1906, 24
        %v1917 = vpop.permute.xlu0 %1916
        %v1919 = vsel %vm1106, %v1903, %v1909
        %vm1920 = vcmask 130048
        %v1921 = vsel %vm1920, %v1919, %v1913
        %vm1922 = vcmask 195584
        %v1923 = vsel %vm1922, %v1921, %v1917
        %v1924 = vld [vmem:[#allocation12] sm:$0xff]
        %v1925 = vld [vmem:[#allocation12 + $0x8] sm:$0xff]
        %v1926 = vld [vmem:[#allocation12 + $0x10] sm:$0xff]
        %v1927 = vld [vmem:[#allocation12 + $0x18] sm:$0xff]
        %v1928 = vld [vmem:[%s7] sm:$0x1]
        %v1930 = vlaneseq
        %v1931 = vshrl.u32 %v1930, 7
        %v1932 = vsub.s32 0, %v1931
        %v1933 = vrot.slane %v1928, %v1932
        %v1936 = vsel %vm877, %v1923, 0
        %1938 = vmatprep.subr.mxu0 0.0
        %1939 = vmatpush1.msra.mxu0 0.0
        %1940 = vmatprep.subr.mxu0 0.0
        %1941 = vmatpush1.msra.mxu0 0.0
        %1942 = vmatprep.subr.mxu0 0.0
        %1943 = vmatpush1.msra.mxu0 0.0
        %1944 = vmatprep.subr.mxu0 0.0
        %1945 = vmatpush1.msra.mxu0 0.0
        %1946 = vmatprep.subr.mxu0 0.0
        %1947 = vmatpush1.msra.mxu0 0.0
        %1948 = vmatprep.subr.mxu0 0.0
        %1949 = vmatpush1.msra.mxu0 0.0
        %1950 = vmatprep.subr.mxu0 0.0
        %1951 = vmatpush1.msra.mxu0 0.0
        %1952 = vmatprep.subr.mxu0 0.0
        %1953 = vmatpush1.msra.mxu0 0.0
        %1954 = vmatprep.subr.mxu0 0.0
        %1955 = vmatpush1.msra.mxu0 0.0
        %1956 = vmatprep.subr.mxu0 0.0
        %1957 = vmatpush1.msra.mxu0 0.0
        %1958 = vmatprep.subr.mxu0 0.0
        %1959 = vmatpush1.msra.mxu0 0.0
        %1960 = vmatprep.subr.mxu0 0.0
        %1961 = vmatpush1.msra.mxu0 0.0
        %1962 = vmatprep.subr.mxu0 0.0
        %1963 = vmatpush1.msra.mxu0 %v1927
        %1964 = vmatprep.subr.mxu0 0.0
        %1965 = vmatpush1.msra.mxu0 %v1926
        %1966 = vmatprep.subr.mxu0 0.0
        %1967 = vmatpush1.msra.mxu0 %v1925
        %1968 = vmatprep.subr.mxu0 0.0
        %1969 = vmatpush1.msra.mxu0 %v1924
        %1970 = vmatprep.subr.mxu0 0.0
        %1971 = vmatpush2.msra.mxu0 0.0
        %1972 = vmatprep.subr.mxu0 0.0
        %1973 = vmatpush2.msra.mxu0 0.0
        %1974 = vmatprep.subr.mxu0 0.0
        %1975 = vmatpush2.msra.mxu0 0.0
        %1976 = vmatprep.subr.mxu0 0.0
        %1977 = vmatpush2.msra.mxu0 0.0
        %1978 = vmatprep.subr.mxu0 0.0
        %1979 = vmatpush2.msra.mxu0 0.0
        %1980 = vmatprep.subr.mxu0 0.0
        %1981 = vmatpush2.msra.mxu0 0.0
        %1982 = vmatprep.subr.mxu0 0.0
        %1983 = vmatpush2.msra.mxu0 0.0
        %1984 = vmatprep.subr.mxu0 0.0
        %1985 = vmatpush2.msra.mxu0 0.0
        %1986 = vmatprep.subr.mxu0 0.0
        %1987 = vmatpush2.msra.mxu0 0.0
        %1988 = vmatprep.subr.mxu0 0.0
        %1989 = vmatpush2.msra.mxu0 0.0
        %1990 = vmatprep.subr.mxu0 0.0
        %1991 = vmatpush2.msra.mxu0 0.0
        %1992 = vmatprep.subr.mxu0 0.0
        %1993 = vmatpush2.msra.mxu0 0.0
        %1994 = vmatprep.subr.mxu0 0.0
        %1995 = vmatpush2.msra.mxu0 0.0
        %1996 = vmatprep.subr.mxu0 0.0
        %1997 = vmatpush2.msra.mxu0 0.0
        %1998 = vmatprep.subr.mxu0 0.0
        %1999 = vmatpush2.msra.mxu0 0.0
        %2000 = vmatprep.subr.mxu0 0.0
        %2001 = vmatpush2.msra.mxu0 0.0
        %2002 = vmatprep.mubr.f32.mxu0 0.0
        %2003 = vmatmul.mubr.f32.gmra.mxu0 %v1936
        %v2004 = vpop.f32.mrf.mxu0
        %v2005 = vadd.f32 %v1933, %v2004
        %v2006 = vpop.f32.mrf.mxu0
        %2007 = vdwg.mxu0
        %v2008 = vld [vmem:[%s8] sm:$0x1]
        %v2009 = vld [vmem:[%s9] sm:$0x1]
        %v2010 = vadd.f32 %v472, %v2005
        %v2011 = vsel %vm877, %v2010, 0.0
        %2012 = vadd.xlane.f32.xlu0 %v2011
        %v2013 = vpop.xlane.xlu0 %2012
        %v2014 = vrcp.pop 32.0
        %v2015 = vmul.f32 %v2013, %v2014
        %v2016 = vsub.f32 %v2010, %v2015
        %v2017 = vmul.f32 %v2016, %v2016
        %v2018 = vsel %vm877, %v2017, 0.0
        %2019 = vadd.xlane.f32.xlu0 %v2018
        %v2020 = vpop.xlane.xlu0 %2019
        %v2021 = vmul.f32 %v2020, %v2014
        %v2022 = vadd.f32 %v2021, 1e-05
        %v2023 = vrsqrt.pop %v2022
        %v2024 = vmul.f32 %v2016, %v2023
        %v2026 = vlaneseq
        %v2027 = vshrl.u32 %v2026, 7
        %v2028 = vsub.s32 0, %v2027
        %v2029 = vrot.slane %v2008, %v2028
        %v2031 = vmul.f32 %v2024, %v2029
        %v2033 = vlaneseq
        %v2034 = vshrl.u32 %v2033, 7
        %v2035 = vsub.s32 0, %v2034
        %v2036 = vrot.slane %v2009, %v2035
        %v2038 = vadd.f32 %v2031, %v2036
        %2039 = vst.msk [vmem:[%s471] sm:$0xff] %vm877, %v2038
        %s2040 = sand.u32 %s275, 1
        %s2041 = scalar_lea.sflag [#allocation6], %s2040
        %s2042 = sand.u32 %s275, 1
        %s2043 = smul.addr %s2042, 8
        %s2044 = scalar_lea.vmem [#allocation13], %s2043
        // Predicated region
        $region85: #{tpu_custom_call.1} parent=59 // pred_check
          %p2045 = pneg %p285
        $region86: #{tpu_custom_call.1} parent=59 // pred_check_branch
          %2047 = sbr.rel (%p2045) target = $region88
        $region87: #{tpu_custom_call.1} parent=59 // pred_region
          %s2049 = ssub.s32 128, 128
          %2050 = vsyncadd %s2041, %s2049
          %s2051 = sadd.s32 %s36, %s35
          %s2052 = smul.addr %s2051, 128
          %s2053 = scalar_lea.hbm %s10, %s2052
          %s2055 = sshll.u32 %s2044, 4
          %s2056 = int_to_ptr.vmem [resolvable:$true] %s2055
          %2058 = dma.vmem_to_hbm [thread:$0]  %s2056, 128, %s2053, %s2041
        $region88: #{tpu_custom_call.1} parent=59 // pred_fallthru
          _
      $region60: #{tpu_custom_call.1} parent=5 // pred_fallthru
        _
      %p2059 = scmp.le.s32.totalorder 2, %s26
      // Predicated region
      $region89: #{tpu_custom_call.1} parent=5 // pred_check
        %p2060 = pneg %p2059
      $region90: #{tpu_custom_call.1} parent=5 // pred_check_branch
        %2062 = sbr.rel (%p2060) target = $region92
      $region91: #{tpu_custom_call.1} parent=5 // pred_region
        %s2063 = ssub.s32 %s26, 2
        // Predicated region
        $region93: #{tpu_custom_call.1} parent=91 // pred_check
          %p2064 = pneg %p291
        $region94: #{tpu_custom_call.1} parent=91 // pred_check_branch
          %2066 = sbr.rel (%p2064) target = $region96
        $region95: #{tpu_custom_call.1} parent=91 // pred_region
          %s2067 = sand.u32 %s276, 1
          %s2068 = scalar_lea.sflag [#allocation6], %s2067
          %s2069 = sand.u32 %s276, 1
          %s2070 = smul.addr %s2069, 8
          %s2071 = scalar_lea.vmem [#allocation13], %s2070
          %2072 = dma.done %s2068, 128
        $region96: #{tpu_custom_call.1} parent=91 // pred_fallthru
          _
      $region92: #{tpu_custom_call.1} parent=5 // pred_fallthru
        _
    $region6: #{tpu_custom_call.1} parent=1 // loop_footer
      %s30 = sadd.s32 1, %s26
    $region7: #{tpu_custom_call.1} parent=1 // loop_footer_branch
      %25 = sbr.rel target = $region3
    $region8: #{tpu_custom_call.1} parent=1 // loop_exit
      _
    %2073 = vsyncpa [#allocation5], 1
    %s2074 = scalar_lea.sflag [#allocation5], 1
    %2075 = vsyncpa %s2074, 1
    %2076 = vsyncpa [#allocation8], 1
    %s2077 = scalar_lea.sflag [#allocation8], 1
    %2078 = vsyncpa %s2077, 1
    %2079 = vsyncpa [#allocation11], 1
    %2080 = vsyncpa [#allocation6], 1
    %s2081 = scalar_lea.sflag [#allocation6], 1
    %2082 = vsyncpa %s2081, 1

</llo_original>
